<compile_context>
chip_gen: v7x
topology: tpu7x:2x2x1
jax: 0.10.0
libtpu: 0.0.40
codegen_flags: <defaults>
</compile_context>

<pallas_src>
import jax
import jax.numpy as jnp
from jax.experimental import pallas as pl
from jax.experimental.pallas import tpu as pltpu


def _make_lstm_encoder_kernel(num_layers):
    """Kernel factory; closes over the (static) number of LSTM layers."""

    def kernel(*refs):
        # refs layout:
        #   [0]                   x_ref             (T, bb, E)      f32
        #   [1 .. 3L]             per layer: w_ih (E_l, 4H) bf16,
        #                                    w_hh (H, 4H)  bf16,
        #                                    b    (1, 4H)  f32
        #   [1+3L, 2+3L]          w_head (H, 2*latent) f32, b_head (1, 2*latent) f32
        #   [3+3L]                out_ref (bb, 2*latent) f32  (packed means|logvar)
        x_ref = refs[0]
        lw = refs[1:1 + 3 * num_layers]
        w_head_ref, b_head_ref = refs[1 + 3 * num_layers: 3 + 3 * num_layers]
        out_ref = refs[3 + 3 * num_layers]

        T, bb, E = x_ref.shape
        hd = lw[1].shape[0]                      # w_hh: (H, 4H)

        # Layer-0 input for ALL timesteps, time-major flattened: (T*bb, E) bf16.
        seq = x_ref[...].reshape(T * bb, E).astype(jnp.bfloat16)

        c = None
        for l in range(num_layers):
            w_ih_ref = lw[3 * l]
            w_hh_ref = lw[3 * l + 1]
            b_ref = lw[3 * l + 2]

            # Hoisted input projection: one big MXU pass for the whole sequence.
            pre = (jnp.dot(seq, w_ih_ref[...],
                           preferred_element_type=jnp.float32)
                   + b_ref[...])                                  # (T*bb, 4H) f32

            h = jnp.zeros((bb, hd), jnp.bfloat16)                 # bf16-resident state
            c = jnp.zeros((bb, hd), jnp.float32)
            outs = []
            # Fully unrolled in-kernel time loop; h/c stay in vregs.
            for t in range(T):
                gates = (pre[t * bb:(t + 1) * bb, :]
                         + jnp.dot(h, w_hh_ref[...],
                                   preferred_element_type=jnp.float32))
                # Fused nonlinearities: one sigmoid over [i|f|o], one tanh over g.
                ifo = jax.nn.sigmoid(gates[:, :3 * hd])
                g = jnp.tanh(gates[:, 3 * hd:])
                i_g = ifo[:, 0 * hd:1 * hd]
                f_g = ifo[:, 1 * hd:2 * hd]
                o_g = ifo[:, 2 * hd:3 * hd]
                c = f_g * c + i_g * g
                h_f32 = o_g * jnp.tanh(c)
                h = h_f32.astype(jnp.bfloat16)
                outs.append(h_f32)
            # Next layer's input sequence (time-major), single cast per layer.
            seq = jnp.concatenate(outs, axis=0).astype(jnp.bfloat16)

        # Module projects the last layer's final CELL state (c_n).  Both heads
        # merged into one matmul and one packed store.
        out_ref[...] = (jnp.dot(c, w_head_ref[...],
                                preferred_element_type=jnp.float32)
                        + b_head_ref[...])

    return kernel


def lstm_encoder_forward(x, params, batch_block=8):
    """Fused Pallas forward for LSTMEncoder.  x: (B, T, input_size) f32."""
    lstm_params, wm, bm, wv, bv = params
    B, T, E = x.shape
    L = len(lstm_params)
    latent = wm.shape[1]

    # Batch block: multiple of 8 sublanes (full, unmasked vreg tiles).  Don't
    # bake bb = B; a "parallel" batch grid axis shards across TCs on v7x.
    bb = max(8, ((batch_block + 7) // 8) * 8)
    nb = pl.cdiv(B, bb)
    B_pad = nb * bb

    # Time-major layout, zero-pad batch to B_pad.  One whole-x DMA per batch
    # block instead of T micro-DMAs.
    x_tbe = jnp.transpose(x, (1, 0, 2)).astype(jnp.float32)        # (T, B, E)
    if B_pad != B:
        x_tbe = jnp.pad(x_tbe, ((0, 0), (0, B_pad - B), (0, 0)))

    inputs = [x_tbe]
    in_specs = [pl.BlockSpec((T, bb, E), lambda b: (0, b, 0))]

    # LSTM weights: VMEM-resident (constant index_map), bf16 matmul operands.
    for (w_ih, w_hh, bvec) in lstm_params:
        for p in (w_ih.astype(jnp.bfloat16),
                  w_hh.astype(jnp.bfloat16),
                  bvec.reshape(1, -1).astype(jnp.float32)):
            in_specs.append(pl.BlockSpec(p.shape, lambda b: (0, 0)))
            inputs.append(p)

    # Merged projection heads: [wm | wv] and [bm | bv].
    w_head = jnp.concatenate([wm, wv], axis=1).astype(jnp.float32)
    b_head = jnp.concatenate([bm, bv]).reshape(1, -1).astype(jnp.float32)
    for p in (w_head, b_head):
        in_specs.append(pl.BlockSpec(p.shape, lambda b: (0, 0)))
        inputs.append(p)

    out = pl.pallas_call(
        _make_lstm_encoder_kernel(L),
        grid=(nb,),
        in_specs=in_specs,
        out_specs=pl.BlockSpec((bb, 2 * latent), lambda b: (b, 0)),
        out_shape=jax.ShapeDtypeStruct((B_pad, 2 * latent), jnp.float32),
        compiler_params=pltpu.CompilerParams(
            dimension_semantics=("parallel",),
            vmem_limit_bytes=32 * 1024 * 1024),
    )(*inputs)

    means = out[:B, :latent]
    logvar = out[:B, latent:]
    return means, logvar


def init_lstm_encoder_params(key, input_size, hidden_size, num_layers, latent_size):
    """Deterministic synthetic weights.  Gate order [i, f, o, g]; b = b_ih + b_hh."""
    lstm_params = []
    for l in range(num_layers):
        in_dim = input_size if l == 0 else hidden_size
        key, k_ih, k_hh, k_b = jax.random.split(key, 4)
        w_ih = jax.random.normal(k_ih, (in_dim, 4 * hidden_size), jnp.float32) * 0.08
        w_hh = jax.random.normal(k_hh, (hidden_size, 4 * hidden_size), jnp.float32) * 0.08
        b = jax.random.normal(k_b, (4 * hidden_size,), jnp.float32) * 0.08
        lstm_params.append((w_ih, w_hh, b))
    key, km, kbm, kv, kbv = jax.random.split(key, 5)
    wm = jax.random.normal(km, (hidden_size, latent_size), jnp.float32) * 0.1
    bm = jax.random.normal(kbm, (latent_size,), jnp.float32) * 0.1
    wv = jax.random.normal(kv, (hidden_size, latent_size), jnp.float32) * 0.1
    bv = jax.random.normal(kbv, (latent_size,), jnp.float32) * 0.1
    return (lstm_params, wm, bm, wv, bv)


def lstm_encoder_reference(x, params):
    """Pure-JAX f32 reference with the same weight layout (mirrors nn.LSTM math)."""
    lstm_params, wm, bm, wv, bv = params
    B, T, _ = x.shape
    hd = wm.shape[0]
    seq = x.astype(jnp.float32)
    c = None
    for (w_ih, w_hh, b) in lstm_params:
        h = jnp.zeros((B, hd), jnp.float32)
        c = jnp.zeros((B, hd), jnp.float32)
        outs = []
        for t in range(T):
            gates = seq[:, t] @ w_ih + h @ w_hh + b
            i = jax.nn.sigmoid(gates[:, 0 * hd:1 * hd])
            f = jax.nn.sigmoid(gates[:, 1 * hd:2 * hd])
            o = jax.nn.sigmoid(gates[:, 2 * hd:3 * hd])
            g = jnp.tanh(gates[:, 3 * hd:4 * hd])
            c = f * c + i * g
            h = o * jnp.tanh(c)
            outs.append(h)
        seq = jnp.stack(outs, axis=1)
    # Module takes the last layer's final CELL state and projects it.
    means = c @ wm + bm
    logvar = c @ wv + bv
    return means, logvar


if __name__ == "__main__":
    # layer_dim_list = [input_size, hidden_size, num_layers, latent_size]
    B, T = 2, 8
    INPUT_SIZE, HIDDEN, NUM_LAYERS, LATENT = 64, 32, 2, 16

    key = jax.random.PRNGKey(0)
    kx, kp = jax.random.split(key)
    x = jax.random.normal(kx, (B, T, INPUT_SIZE), jnp.float32)
    params = init_lstm_encoder_params(kp, INPUT_SIZE, HIDDEN, NUM_LAYERS, LATENT)

    means, logvar = lstm_encoder_forward(x, params)
    means = jax.block_until_ready(means)
    logvar = jax.block_until_ready(logvar)

    ref_means, ref_logvar = lstm_encoder_reference(x, params)

    assert means.shape == (B, LATENT)
    assert logvar.shape == (B, LATENT)
    assert bool(jnp.all(jnp.isfinite(means)))
    assert bool(jnp.all(jnp.isfinite(logvar)))
    # bf16 matmul inputs inside the kernel vs f32 reference -> tolerance check.
    assert float(jnp.max(jnp.abs(means - ref_means))) < 5e-2
    assert float(jnp.max(jnp.abs(logvar - ref_logvar))) < 5e-2

    print("KERNEL_OK")
</pallas_src>

<mosaic_0001>
module attributes {stable_mosaic.version = 11 : i64} {
  func.func @kernel(%arg0: i32, %arg1: memref<8x8x64xf32, #tpu.memory_space<vmem>>, %arg2: memref<64x128xbf16, #tpu.memory_space<vmem>>, %arg3: memref<32x128xbf16, #tpu.memory_space<vmem>>, %arg4: memref<1x128xf32, #tpu.memory_space<vmem>>, %arg5: memref<32x128xbf16, #tpu.memory_space<vmem>>, %arg6: memref<32x128xbf16, #tpu.memory_space<vmem>>, %arg7: memref<1x128xf32, #tpu.memory_space<vmem>>, %arg8: memref<32x32xf32, #tpu.memory_space<vmem>>, %arg9: memref<1x32xf32, #tpu.memory_space<vmem>>, %arg10: memref<8x32xf32, #tpu.memory_space<vmem>>) attributes {dimension_semantics = [#tpu.dimension_semantics<parallel>], iteration_bounds = array<i64: 1>, scalar_prefetch = 0 : i64, scratch_operands = 0 : i64, tpu.core_type = #tpu.core_type<tc>, window_params = [{transform_indices = @transform_0, window_bounds = array<i64: 8, 8, 64>}, {pipeline_mode = #tpu.pipeline_mode<synchronous>, transform_indices = @transform_1, window_bounds = array<i64: 64, 128>}, {pipeline_mode = #tpu.pipeline_mode<synchronous>, transform_indices = @transform_2, window_bounds = array<i64: 32, 128>}, {pipeline_mode = #tpu.pipeline_mode<synchronous>, transform_indices = @transform_3, window_bounds = array<i64: 1, 128>}, {pipeline_mode = #tpu.pipeline_mode<synchronous>, transform_indices = @transform_4, window_bounds = array<i64: 32, 128>}, {pipeline_mode = #tpu.pipeline_mode<synchronous>, transform_indices = @transform_5, window_bounds = array<i64: 32, 128>}, {pipeline_mode = #tpu.pipeline_mode<synchronous>, transform_indices = @transform_6, window_bounds = array<i64: 1, 128>}, {pipeline_mode = #tpu.pipeline_mode<synchronous>, transform_indices = @transform_7, window_bounds = array<i64: 32, 32>}, {pipeline_mode = #tpu.pipeline_mode<synchronous>, transform_indices = @transform_8, window_bounds = array<i64: 1, 32>}, {transform_indices = @transform_9, window_bounds = array<i64: 8, 32>}]} {
    %c0 = arith.constant 0 : index
    %c0_0 = arith.constant 0 : index
    %c0_1 = arith.constant 0 : index
    %0 = vector.load %arg1[%c0, %c0_0, %c0_1] : memref<8x8x64xf32, #tpu.memory_space<vmem>>, vector<8x8x64xf32>
    %1 = vector.shape_cast %0 : vector<8x8x64xf32> to vector<64x64xf32>
    %2 = arith.truncf %1 : vector<64x64xf32> to vector<64x64xbf16>
    %c0_2 = arith.constant 0 : index
    %c0_3 = arith.constant 0 : index
    %3 = vector.load %arg2[%c0_2, %c0_3] : memref<64x128xbf16, #tpu.memory_space<vmem>>, vector<64x128xbf16>
    %cst = arith.constant dense<0.000000e+00> : vector<64x128xf32>
    %4 = tpu.matmul %2, %3, %cst {dimension_numbers = #tpu.dot_dimension_numbers<[1], [0], [0], [1], [0, 0, 1, 1], [], []>} : vector<64x64xbf16>, vector<64x128xbf16>, vector<64x128xf32> -> vector<64x128xf32>
    %c0_4 = arith.constant 0 : index
    %c0_5 = arith.constant 0 : index
    %5 = vector.load %arg4[%c0_4, %c0_5] : memref<1x128xf32, #tpu.memory_space<vmem>>, vector<1x128xf32>
    %6 = vector.broadcast %5 : vector<1x128xf32> to vector<64x128xf32>
    %7 = arith.addf %4, %6 : vector<64x128xf32>
    %cst_6 = arith.constant 0.000000e+00 : bf16
    %8 = vector.broadcast %cst_6 : bf16 to vector<8x32xbf16>
    %cst_7 = arith.constant 0.000000e+00 : f32
    %9 = vector.broadcast %cst_7 : f32 to vector<8x32xf32>
    %10 = vector.extract_strided_slice %7 {offsets = [0, 0], sizes = [8, 128], strides = [1, 1]} : vector<64x128xf32> to vector<8x128xf32>
    %c0_8 = arith.constant 0 : index
    %c0_9 = arith.constant 0 : index
    %11 = vector.load %arg3[%c0_8, %c0_9] : memref<32x128xbf16, #tpu.memory_space<vmem>>, vector<32x128xbf16>
    %cst_10 = arith.constant dense<0.000000e+00> : vector<8x128xf32>
    %12 = tpu.matmul %8, %11, %cst_10 {dimension_numbers = #tpu.dot_dimension_numbers<[1], [0], [0], [1], [0, 0, 1, 1], [], []>} : vector<8x32xbf16>, vector<32x128xbf16>, vector<8x128xf32> -> vector<8x128xf32>
    %13 = arith.addf %10, %12 : vector<8x128xf32>
    %14 = vector.extract_strided_slice %13 {offsets = [0, 0], sizes = [8, 96], strides = [1, 1]} : vector<8x128xf32> to vector<8x96xf32>
    %15 = arith.negf %14 : vector<8x96xf32>
    %16 = math.exp %15 : vector<8x96xf32>
    %cst_11 = arith.constant 1.000000e+00 : f32
    %17 = vector.broadcast %cst_11 : f32 to vector<8x96xf32>
    %18 = arith.addf %17, %16 : vector<8x96xf32>
    %19 = arith.divf %17, %18 : vector<8x96xf32>
    %20 = vector.extract_strided_slice %13 {offsets = [0, 96], sizes = [8, 32], strides = [1, 1]} : vector<8x128xf32> to vector<8x32xf32>
    %21 = math.tanh %20 : vector<8x32xf32>
    %22 = vector.extract_strided_slice %19 {offsets = [0, 0], sizes = [8, 32], strides = [1, 1]} : vector<8x96xf32> to vector<8x32xf32>
    %23 = vector.extract_strided_slice %19 {offsets = [0, 32], sizes = [8, 32], strides = [1, 1]} : vector<8x96xf32> to vector<8x32xf32>
    %24 = vector.extract_strided_slice %19 {offsets = [0, 64], sizes = [8, 32], strides = [1, 1]} : vector<8x96xf32> to vector<8x32xf32>
    %25 = arith.mulf %23, %9 : vector<8x32xf32>
    %26 = arith.mulf %22, %21 : vector<8x32xf32>
    %27 = arith.addf %25, %26 : vector<8x32xf32>
    %28 = math.tanh %27 : vector<8x32xf32>
    %29 = arith.mulf %24, %28 : vector<8x32xf32>
    %30 = arith.truncf %29 : vector<8x32xf32> to vector<8x32xbf16>
    %31 = vector.extract_strided_slice %7 {offsets = [8, 0], sizes = [8, 128], strides = [1, 1]} : vector<64x128xf32> to vector<8x128xf32>
    %c0_12 = arith.constant 0 : index
    %c0_13 = arith.constant 0 : index
    %32 = vector.load %arg3[%c0_12, %c0_13] : memref<32x128xbf16, #tpu.memory_space<vmem>>, vector<32x128xbf16>
    %cst_14 = arith.constant dense<0.000000e+00> : vector<8x128xf32>
    %33 = tpu.matmul %30, %32, %cst_14 {dimension_numbers = #tpu.dot_dimension_numbers<[1], [0], [0], [1], [0, 0, 1, 1], [], []>} : vector<8x32xbf16>, vector<32x128xbf16>, vector<8x128xf32> -> vector<8x128xf32>
    %34 = arith.addf %31, %33 : vector<8x128xf32>
    %35 = vector.extract_strided_slice %34 {offsets = [0, 0], sizes = [8, 96], strides = [1, 1]} : vector<8x128xf32> to vector<8x96xf32>
    %36 = arith.negf %35 : vector<8x96xf32>
    %37 = math.exp %36 : vector<8x96xf32>
    %cst_15 = arith.constant 1.000000e+00 : f32
    %38 = vector.broadcast %cst_15 : f32 to vector<8x96xf32>
    %39 = arith.addf %38, %37 : vector<8x96xf32>
    %40 = arith.divf %38, %39 : vector<8x96xf32>
    %41 = vector.extract_strided_slice %34 {offsets = [0, 96], sizes = [8, 32], strides = [1, 1]} : vector<8x128xf32> to vector<8x32xf32>
    %42 = math.tanh %41 : vector<8x32xf32>
    %43 = vector.extract_strided_slice %40 {offsets = [0, 0], sizes = [8, 32], strides = [1, 1]} : vector<8x96xf32> to vector<8x32xf32>
    %44 = vector.extract_strided_slice %40 {offsets = [0, 32], sizes = [8, 32], strides = [1, 1]} : vector<8x96xf32> to vector<8x32xf32>
    %45 = vector.extract_strided_slice %40 {offsets = [0, 64], sizes = [8, 32], strides = [1, 1]} : vector<8x96xf32> to vector<8x32xf32>
    %46 = arith.mulf %44, %27 : vector<8x32xf32>
    %47 = arith.mulf %43, %42 : vector<8x32xf32>
    %48 = arith.addf %46, %47 : vector<8x32xf32>
    %49 = math.tanh %48 : vector<8x32xf32>
    %50 = arith.mulf %45, %49 : vector<8x32xf32>
    %51 = arith.truncf %50 : vector<8x32xf32> to vector<8x32xbf16>
    %52 = vector.extract_strided_slice %7 {offsets = [16, 0], sizes = [8, 128], strides = [1, 1]} : vector<64x128xf32> to vector<8x128xf32>
    %c0_16 = arith.constant 0 : index
    %c0_17 = arith.constant 0 : index
    %53 = vector.load %arg3[%c0_16, %c0_17] : memref<32x128xbf16, #tpu.memory_space<vmem>>, vector<32x128xbf16>
    %cst_18 = arith.constant dense<0.000000e+00> : vector<8x128xf32>
    %54 = tpu.matmul %51, %53, %cst_18 {dimension_numbers = #tpu.dot_dimension_numbers<[1], [0], [0], [1], [0, 0, 1, 1], [], []>} : vector<8x32xbf16>, vector<32x128xbf16>, vector<8x128xf32> -> vector<8x128xf32>
    %55 = arith.addf %52, %54 : vector<8x128xf32>
    %56 = vector.extract_strided_slice %55 {offsets = [0, 0], sizes = [8, 96], strides = [1, 1]} : vector<8x128xf32> to vector<8x96xf32>
    %57 = arith.negf %56 : vector<8x96xf32>
    %58 = math.exp %57 : vector<8x96xf32>
    %cst_19 = arith.constant 1.000000e+00 : f32
    %59 = vector.broadcast %cst_19 : f32 to vector<8x96xf32>
    %60 = arith.addf %59, %58 : vector<8x96xf32>
    %61 = arith.divf %59, %60 : vector<8x96xf32>
    %62 = vector.extract_strided_slice %55 {offsets = [0, 96], sizes = [8, 32], strides = [1, 1]} : vector<8x128xf32> to vector<8x32xf32>
    %63 = math.tanh %62 : vector<8x32xf32>
    %64 = vector.extract_strided_slice %61 {offsets = [0, 0], sizes = [8, 32], strides = [1, 1]} : vector<8x96xf32> to vector<8x32xf32>
    %65 = vector.extract_strided_slice %61 {offsets = [0, 32], sizes = [8, 32], strides = [1, 1]} : vector<8x96xf32> to vector<8x32xf32>
    %66 = vector.extract_strided_slice %61 {offsets = [0, 64], sizes = [8, 32], strides = [1, 1]} : vector<8x96xf32> to vector<8x32xf32>
    %67 = arith.mulf %65, %48 : vector<8x32xf32>
    %68 = arith.mulf %64, %63 : vector<8x32xf32>
    %69 = arith.addf %67, %68 : vector<8x32xf32>
    %70 = math.tanh %69 : vector<8x32xf32>
    %71 = arith.mulf %66, %70 : vector<8x32xf32>
    %72 = arith.truncf %71 : vector<8x32xf32> to vector<8x32xbf16>
    %73 = vector.extract_strided_slice %7 {offsets = [24, 0], sizes = [8, 128], strides = [1, 1]} : vector<64x128xf32> to vector<8x128xf32>
    %c0_20 = arith.constant 0 : index
    %c0_21 = arith.constant 0 : index
    %74 = vector.load %arg3[%c0_20, %c0_21] : memref<32x128xbf16, #tpu.memory_space<vmem>>, vector<32x128xbf16>
    %cst_22 = arith.constant dense<0.000000e+00> : vector<8x128xf32>
    %75 = tpu.matmul %72, %74, %cst_22 {dimension_numbers = #tpu.dot_dimension_numbers<[1], [0], [0], [1], [0, 0, 1, 1], [], []>} : vector<8x32xbf16>, vector<32x128xbf16>, vector<8x128xf32> -> vector<8x128xf32>
    %76 = arith.addf %73, %75 : vector<8x128xf32>
    %77 = vector.extract_strided_slice %76 {offsets = [0, 0], sizes = [8, 96], strides = [1, 1]} : vector<8x128xf32> to vector<8x96xf32>
    %78 = arith.negf %77 : vector<8x96xf32>
    %79 = math.exp %78 : vector<8x96xf32>
    %cst_23 = arith.constant 1.000000e+00 : f32
    %80 = vector.broadcast %cst_23 : f32 to vector<8x96xf32>
    %81 = arith.addf %80, %79 : vector<8x96xf32>
    %82 = arith.divf %80, %81 : vector<8x96xf32>
    %83 = vector.extract_strided_slice %76 {offsets = [0, 96], sizes = [8, 32], strides = [1, 1]} : vector<8x128xf32> to vector<8x32xf32>
    %84 = math.tanh %83 : vector<8x32xf32>
    %85 = vector.extract_strided_slice %82 {offsets = [0, 0], sizes = [8, 32], strides = [1, 1]} : vector<8x96xf32> to vector<8x32xf32>
    %86 = vector.extract_strided_slice %82 {offsets = [0, 32], sizes = [8, 32], strides = [1, 1]} : vector<8x96xf32> to vector<8x32xf32>
    %87 = vector.extract_strided_slice %82 {offsets = [0, 64], sizes = [8, 32], strides = [1, 1]} : vector<8x96xf32> to vector<8x32xf32>
    %88 = arith.mulf %86, %69 : vector<8x32xf32>
    %89 = arith.mulf %85, %84 : vector<8x32xf32>
    %90 = arith.addf %88, %89 : vector<8x32xf32>
    %91 = math.tanh %90 : vector<8x32xf32>
    %92 = arith.mulf %87, %91 : vector<8x32xf32>
    %93 = arith.truncf %92 : vector<8x32xf32> to vector<8x32xbf16>
    %94 = vector.extract_strided_slice %7 {offsets = [32, 0], sizes = [8, 128], strides = [1, 1]} : vector<64x128xf32> to vector<8x128xf32>
    %c0_24 = arith.constant 0 : index
    %c0_25 = arith.constant 0 : index
    %95 = vector.load %arg3[%c0_24, %c0_25] : memref<32x128xbf16, #tpu.memory_space<vmem>>, vector<32x128xbf16>
    %cst_26 = arith.constant dense<0.000000e+00> : vector<8x128xf32>
    %96 = tpu.matmul %93, %95, %cst_26 {dimension_numbers = #tpu.dot_dimension_numbers<[1], [0], [0], [1], [0, 0, 1, 1], [], []>} : vector<8x32xbf16>, vector<32x128xbf16>, vector<8x128xf32> -> vector<8x128xf32>
    %97 = arith.addf %94, %96 : vector<8x128xf32>
    %98 = vector.extract_strided_slice %97 {offsets = [0, 0], sizes = [8, 96], strides = [1, 1]} : vector<8x128xf32> to vector<8x96xf32>
    %99 = arith.negf %98 : vector<8x96xf32>
    %100 = math.exp %99 : vector<8x96xf32>
    %cst_27 = arith.constant 1.000000e+00 : f32
    %101 = vector.broadcast %cst_27 : f32 to vector<8x96xf32>
    %102 = arith.addf %101, %100 : vector<8x96xf32>
    %103 = arith.divf %101, %102 : vector<8x96xf32>
    %104 = vector.extract_strided_slice %97 {offsets = [0, 96], sizes = [8, 32], strides = [1, 1]} : vector<8x128xf32> to vector<8x32xf32>
    %105 = math.tanh %104 : vector<8x32xf32>
    %106 = vector.extract_strided_slice %103 {offsets = [0, 0], sizes = [8, 32], strides = [1, 1]} : vector<8x96xf32> to vector<8x32xf32>
    %107 = vector.extract_strided_slice %103 {offsets = [0, 32], sizes = [8, 32], strides = [1, 1]} : vector<8x96xf32> to vector<8x32xf32>
    %108 = vector.extract_strided_slice %103 {offsets = [0, 64], sizes = [8, 32], strides = [1, 1]} : vector<8x96xf32> to vector<8x32xf32>
    %109 = arith.mulf %107, %90 : vector<8x32xf32>
    %110 = arith.mulf %106, %105 : vector<8x32xf32>
    %111 = arith.addf %109, %110 : vector<8x32xf32>
    %112 = math.tanh %111 : vector<8x32xf32>
    %113 = arith.mulf %108, %112 : vector<8x32xf32>
    %114 = arith.truncf %113 : vector<8x32xf32> to vector<8x32xbf16>
    %115 = vector.extract_strided_slice %7 {offsets = [40, 0], sizes = [8, 128], strides = [1, 1]} : vector<64x128xf32> to vector<8x128xf32>
    %c0_28 = arith.constant 0 : index
    %c0_29 = arith.constant 0 : index
    %116 = vector.load %arg3[%c0_28, %c0_29] : memref<32x128xbf16, #tpu.memory_space<vmem>>, vector<32x128xbf16>
    %cst_30 = arith.constant dense<0.000000e+00> : vector<8x128xf32>
    %117 = tpu.matmul %114, %116, %cst_30 {dimension_numbers = #tpu.dot_dimension_numbers<[1], [0], [0], [1], [0, 0, 1, 1], [], []>} : vector<8x32xbf16>, vector<32x128xbf16>, vector<8x128xf32> -> vector<8x128xf32>
    %118 = arith.addf %115, %117 : vector<8x128xf32>
    %119 = vector.extract_strided_slice %118 {offsets = [0, 0], sizes = [8, 96], strides = [1, 1]} : vector<8x128xf32> to vector<8x96xf32>
    %120 = arith.negf %119 : vector<8x96xf32>
    %121 = math.exp %120 : vector<8x96xf32>
    %cst_31 = arith.constant 1.000000e+00 : f32
    %122 = vector.broadcast %cst_31 : f32 to vector<8x96xf32>
    %123 = arith.addf %122, %121 : vector<8x96xf32>
    %124 = arith.divf %122, %123 : vector<8x96xf32>
    %125 = vector.extract_strided_slice %118 {offsets = [0, 96], sizes = [8, 32], strides = [1, 1]} : vector<8x128xf32> to vector<8x32xf32>
    %126 = math.tanh %125 : vector<8x32xf32>
    %127 = vector.extract_strided_slice %124 {offsets = [0, 0], sizes = [8, 32], strides = [1, 1]} : vector<8x96xf32> to vector<8x32xf32>
    %128 = vector.extract_strided_slice %124 {offsets = [0, 32], sizes = [8, 32], strides = [1, 1]} : vector<8x96xf32> to vector<8x32xf32>
    %129 = vector.extract_strided_slice %124 {offsets = [0, 64], sizes = [8, 32], strides = [1, 1]} : vector<8x96xf32> to vector<8x32xf32>
    %130 = arith.mulf %128, %111 : vector<8x32xf32>
    %131 = arith.mulf %127, %126 : vector<8x32xf32>
    %132 = arith.addf %130, %131 : vector<8x32xf32>
    %133 = math.tanh %132 : vector<8x32xf32>
    %134 = arith.mulf %129, %133 : vector<8x32xf32>
    %135 = arith.truncf %134 : vector<8x32xf32> to vector<8x32xbf16>
    %136 = vector.extract_strided_slice %7 {offsets = [48, 0], sizes = [8, 128], strides = [1, 1]} : vector<64x128xf32> to vector<8x128xf32>
    %c0_32 = arith.constant 0 : index
    %c0_33 = arith.constant 0 : index
    %137 = vector.load %arg3[%c0_32, %c0_33] : memref<32x128xbf16, #tpu.memory_space<vmem>>, vector<32x128xbf16>
    %cst_34 = arith.constant dense<0.000000e+00> : vector<8x128xf32>
    %138 = tpu.matmul %135, %137, %cst_34 {dimension_numbers = #tpu.dot_dimension_numbers<[1], [0], [0], [1], [0, 0, 1, 1], [], []>} : vector<8x32xbf16>, vector<32x128xbf16>, vector<8x128xf32> -> vector<8x128xf32>
    %139 = arith.addf %136, %138 : vector<8x128xf32>
    %140 = vector.extract_strided_slice %139 {offsets = [0, 0], sizes = [8, 96], strides = [1, 1]} : vector<8x128xf32> to vector<8x96xf32>
    %141 = arith.negf %140 : vector<8x96xf32>
    %142 = math.exp %141 : vector<8x96xf32>
    %cst_35 = arith.constant 1.000000e+00 : f32
    %143 = vector.broadcast %cst_35 : f32 to vector<8x96xf32>
    %144 = arith.addf %143, %142 : vector<8x96xf32>
    %145 = arith.divf %143, %144 : vector<8x96xf32>
    %146 = vector.extract_strided_slice %139 {offsets = [0, 96], sizes = [8, 32], strides = [1, 1]} : vector<8x128xf32> to vector<8x32xf32>
    %147 = math.tanh %146 : vector<8x32xf32>
    %148 = vector.extract_strided_slice %145 {offsets = [0, 0], sizes = [8, 32], strides = [1, 1]} : vector<8x96xf32> to vector<8x32xf32>
    %149 = vector.extract_strided_slice %145 {offsets = [0, 32], sizes = [8, 32], strides = [1, 1]} : vector<8x96xf32> to vector<8x32xf32>
    %150 = vector.extract_strided_slice %145 {offsets = [0, 64], sizes = [8, 32], strides = [1, 1]} : vector<8x96xf32> to vector<8x32xf32>
    %151 = arith.mulf %149, %132 : vector<8x32xf32>
    %152 = arith.mulf %148, %147 : vector<8x32xf32>
    %153 = arith.addf %151, %152 : vector<8x32xf32>
    %154 = math.tanh %153 : vector<8x32xf32>
    %155 = arith.mulf %150, %154 : vector<8x32xf32>
    %156 = arith.truncf %155 : vector<8x32xf32> to vector<8x32xbf16>
    %157 = vector.extract_strided_slice %7 {offsets = [56, 0], sizes = [8, 128], strides = [1, 1]} : vector<64x128xf32> to vector<8x128xf32>
    %c0_36 = arith.constant 0 : index
    %c0_37 = arith.constant 0 : index
    %158 = vector.load %arg3[%c0_36, %c0_37] : memref<32x128xbf16, #tpu.memory_space<vmem>>, vector<32x128xbf16>
    %cst_38 = arith.constant dense<0.000000e+00> : vector<8x128xf32>
    %159 = tpu.matmul %156, %158, %cst_38 {dimension_numbers = #tpu.dot_dimension_numbers<[1], [0], [0], [1], [0, 0, 1, 1], [], []>} : vector<8x32xbf16>, vector<32x128xbf16>, vector<8x128xf32> -> vector<8x128xf32>
    %160 = arith.addf %157, %159 : vector<8x128xf32>
    %161 = vector.extract_strided_slice %160 {offsets = [0, 0], sizes = [8, 96], strides = [1, 1]} : vector<8x128xf32> to vector<8x96xf32>
    %162 = arith.negf %161 : vector<8x96xf32>
    %163 = math.exp %162 : vector<8x96xf32>
    %cst_39 = arith.constant 1.000000e+00 : f32
    %164 = vector.broadcast %cst_39 : f32 to vector<8x96xf32>
    %165 = arith.addf %164, %163 : vector<8x96xf32>
    %166 = arith.divf %164, %165 : vector<8x96xf32>
    %167 = vector.extract_strided_slice %160 {offsets = [0, 96], sizes = [8, 32], strides = [1, 1]} : vector<8x128xf32> to vector<8x32xf32>
    %168 = math.tanh %167 : vector<8x32xf32>
    %169 = vector.extract_strided_slice %166 {offsets = [0, 0], sizes = [8, 32], strides = [1, 1]} : vector<8x96xf32> to vector<8x32xf32>
    %170 = vector.extract_strided_slice %166 {offsets = [0, 32], sizes = [8, 32], strides = [1, 1]} : vector<8x96xf32> to vector<8x32xf32>
    %171 = vector.extract_strided_slice %166 {offsets = [0, 64], sizes = [8, 32], strides = [1, 1]} : vector<8x96xf32> to vector<8x32xf32>
    %172 = arith.mulf %170, %153 : vector<8x32xf32>
    %173 = arith.mulf %169, %168 : vector<8x32xf32>
    %174 = arith.addf %172, %173 : vector<8x32xf32>
    %175 = math.tanh %174 : vector<8x32xf32>
    %176 = arith.mulf %171, %175 : vector<8x32xf32>
    %177 = tpu.concatenate %29, %50, %71, %92, %113, %134, %155, %176 in 0 : vector<8x32xf32>, vector<8x32xf32>, vector<8x32xf32>, vector<8x32xf32>, vector<8x32xf32>, vector<8x32xf32>, vector<8x32xf32>, vector<8x32xf32> -> vector<64x32xf32>
    %178 = arith.truncf %177 : vector<64x32xf32> to vector<64x32xbf16>
    %c0_40 = arith.constant 0 : index
    %c0_41 = arith.constant 0 : index
    %179 = vector.load %arg5[%c0_40, %c0_41] : memref<32x128xbf16, #tpu.memory_space<vmem>>, vector<32x128xbf16>
    %cst_42 = arith.constant dense<0.000000e+00> : vector<64x128xf32>
    %180 = tpu.matmul %178, %179, %cst_42 {dimension_numbers = #tpu.dot_dimension_numbers<[1], [0], [0], [1], [0, 0, 1, 1], [], []>} : vector<64x32xbf16>, vector<32x128xbf16>, vector<64x128xf32> -> vector<64x128xf32>
    %c0_43 = arith.constant 0 : index
    %c0_44 = arith.constant 0 : index
    %181 = vector.load %arg7[%c0_43, %c0_44] : memref<1x128xf32, #tpu.memory_space<vmem>>, vector<1x128xf32>
    %182 = vector.broadcast %181 : vector<1x128xf32> to vector<64x128xf32>
    %183 = arith.addf %180, %182 : vector<64x128xf32>
    %cst_45 = arith.constant 0.000000e+00 : bf16
    %184 = vector.broadcast %cst_45 : bf16 to vector<8x32xbf16>
    %cst_46 = arith.constant 0.000000e+00 : f32
    %185 = vector.broadcast %cst_46 : f32 to vector<8x32xf32>
    %186 = vector.extract_strided_slice %183 {offsets = [0, 0], sizes = [8, 128], strides = [1, 1]} : vector<64x128xf32> to vector<8x128xf32>
    %c0_47 = arith.constant 0 : index
    %c0_48 = arith.constant 0 : index
    %187 = vector.load %arg6[%c0_47, %c0_48] : memref<32x128xbf16, #tpu.memory_space<vmem>>, vector<32x128xbf16>
    %cst_49 = arith.constant dense<0.000000e+00> : vector<8x128xf32>
    %188 = tpu.matmul %184, %187, %cst_49 {dimension_numbers = #tpu.dot_dimension_numbers<[1], [0], [0], [1], [0, 0, 1, 1], [], []>} : vector<8x32xbf16>, vector<32x128xbf16>, vector<8x128xf32> -> vector<8x128xf32>
    %189 = arith.addf %186, %188 : vector<8x128xf32>
    %190 = vector.extract_strided_slice %189 {offsets = [0, 0], sizes = [8, 96], strides = [1, 1]} : vector<8x128xf32> to vector<8x96xf32>
    %191 = arith.negf %190 : vector<8x96xf32>
    %192 = math.exp %191 : vector<8x96xf32>
    %cst_50 = arith.constant 1.000000e+00 : f32
    %193 = vector.broadcast %cst_50 : f32 to vector<8x96xf32>
    %194 = arith.addf %193, %192 : vector<8x96xf32>
    %195 = arith.divf %193, %194 : vector<8x96xf32>
    %196 = vector.extract_strided_slice %189 {offsets = [0, 96], sizes = [8, 32], strides = [1, 1]} : vector<8x128xf32> to vector<8x32xf32>
    %197 = math.tanh %196 : vector<8x32xf32>
    %198 = vector.extract_strided_slice %195 {offsets = [0, 0], sizes = [8, 32], strides = [1, 1]} : vector<8x96xf32> to vector<8x32xf32>
    %199 = vector.extract_strided_slice %195 {offsets = [0, 32], sizes = [8, 32], strides = [1, 1]} : vector<8x96xf32> to vector<8x32xf32>
    %200 = vector.extract_strided_slice %195 {offsets = [0, 64], sizes = [8, 32], strides = [1, 1]} : vector<8x96xf32> to vector<8x32xf32>
    %201 = arith.mulf %199, %185 : vector<8x32xf32>
    %202 = arith.mulf %198, %197 : vector<8x32xf32>
    %203 = arith.addf %201, %202 : vector<8x32xf32>
    %204 = math.tanh %203 : vector<8x32xf32>
    %205 = arith.mulf %200, %204 : vector<8x32xf32>
    %206 = arith.truncf %205 : vector<8x32xf32> to vector<8x32xbf16>
    %207 = vector.extract_strided_slice %183 {offsets = [8, 0], sizes = [8, 128], strides = [1, 1]} : vector<64x128xf32> to vector<8x128xf32>
    %c0_51 = arith.constant 0 : index
    %c0_52 = arith.constant 0 : index
    %208 = vector.load %arg6[%c0_51, %c0_52] : memref<32x128xbf16, #tpu.memory_space<vmem>>, vector<32x128xbf16>
    %cst_53 = arith.constant dense<0.000000e+00> : vector<8x128xf32>
    %209 = tpu.matmul %206, %208, %cst_53 {dimension_numbers = #tpu.dot_dimension_numbers<[1], [0], [0], [1], [0, 0, 1, 1], [], []>} : vector<8x32xbf16>, vector<32x128xbf16>, vector<8x128xf32> -> vector<8x128xf32>
    %210 = arith.addf %207, %209 : vector<8x128xf32>
    %211 = vector.extract_strided_slice %210 {offsets = [0, 0], sizes = [8, 96], strides = [1, 1]} : vector<8x128xf32> to vector<8x96xf32>
    %212 = arith.negf %211 : vector<8x96xf32>
    %213 = math.exp %212 : vector<8x96xf32>
    %cst_54 = arith.constant 1.000000e+00 : f32
    %214 = vector.broadcast %cst_54 : f32 to vector<8x96xf32>
    %215 = arith.addf %214, %213 : vector<8x96xf32>
    %216 = arith.divf %214, %215 : vector<8x96xf32>
    %217 = vector.extract_strided_slice %210 {offsets = [0, 96], sizes = [8, 32], strides = [1, 1]} : vector<8x128xf32> to vector<8x32xf32>
    %218 = math.tanh %217 : vector<8x32xf32>
    %219 = vector.extract_strided_slice %216 {offsets = [0, 0], sizes = [8, 32], strides = [1, 1]} : vector<8x96xf32> to vector<8x32xf32>
    %220 = vector.extract_strided_slice %216 {offsets = [0, 32], sizes = [8, 32], strides = [1, 1]} : vector<8x96xf32> to vector<8x32xf32>
    %221 = vector.extract_strided_slice %216 {offsets = [0, 64], sizes = [8, 32], strides = [1, 1]} : vector<8x96xf32> to vector<8x32xf32>
    %222 = arith.mulf %220, %203 : vector<8x32xf32>
    %223 = arith.mulf %219, %218 : vector<8x32xf32>
    %224 = arith.addf %222, %223 : vector<8x32xf32>
    %225 = math.tanh %224 : vector<8x32xf32>
    %226 = arith.mulf %221, %225 : vector<8x32xf32>
    %227 = arith.truncf %226 : vector<8x32xf32> to vector<8x32xbf16>
    %228 = vector.extract_strided_slice %183 {offsets = [16, 0], sizes = [8, 128], strides = [1, 1]} : vector<64x128xf32> to vector<8x128xf32>
    %c0_55 = arith.constant 0 : index
    %c0_56 = arith.constant 0 : index
    %229 = vector.load %arg6[%c0_55, %c0_56] : memref<32x128xbf16, #tpu.memory_space<vmem>>, vector<32x128xbf16>
    %cst_57 = arith.constant dense<0.000000e+00> : vector<8x128xf32>
    %230 = tpu.matmul %227, %229, %cst_57 {dimension_numbers = #tpu.dot_dimension_numbers<[1], [0], [0], [1], [0, 0, 1, 1], [], []>} : vector<8x32xbf16>, vector<32x128xbf16>, vector<8x128xf32> -> vector<8x128xf32>
    %231 = arith.addf %228, %230 : vector<8x128xf32>
    %232 = vector.extract_strided_slice %231 {offsets = [0, 0], sizes = [8, 96], strides = [1, 1]} : vector<8x128xf32> to vector<8x96xf32>
    %233 = arith.negf %232 : vector<8x96xf32>
    %234 = math.exp %233 : vector<8x96xf32>
    %cst_58 = arith.constant 1.000000e+00 : f32
    %235 = vector.broadcast %cst_58 : f32 to vector<8x96xf32>
    %236 = arith.addf %235, %234 : vector<8x96xf32>
    %237 = arith.divf %235, %236 : vector<8x96xf32>
    %238 = vector.extract_strided_slice %231 {offsets = [0, 96], sizes = [8, 32], strides = [1, 1]} : vector<8x128xf32> to vector<8x32xf32>
    %239 = math.tanh %238 : vector<8x32xf32>
    %240 = vector.extract_strided_slice %237 {offsets = [0, 0], sizes = [8, 32], strides = [1, 1]} : vector<8x96xf32> to vector<8x32xf32>
    %241 = vector.extract_strided_slice %237 {offsets = [0, 32], sizes = [8, 32], strides = [1, 1]} : vector<8x96xf32> to vector<8x32xf32>
    %242 = vector.extract_strided_slice %237 {offsets = [0, 64], sizes = [8, 32], strides = [1, 1]} : vector<8x96xf32> to vector<8x32xf32>
    %243 = arith.mulf %241, %224 : vector<8x32xf32>
    %244 = arith.mulf %240, %239 : vector<8x32xf32>
    %245 = arith.addf %243, %244 : vector<8x32xf32>
    %246 = math.tanh %245 : vector<8x32xf32>
    %247 = arith.mulf %242, %246 : vector<8x32xf32>
    %248 = arith.truncf %247 : vector<8x32xf32> to vector<8x32xbf16>
    %249 = vector.extract_strided_slice %183 {offsets = [24, 0], sizes = [8, 128], strides = [1, 1]} : vector<64x128xf32> to vector<8x128xf32>
    %c0_59 = arith.constant 0 : index
    %c0_60 = arith.constant 0 : index
    %250 = vector.load %arg6[%c0_59, %c0_60] : memref<32x128xbf16, #tpu.memory_space<vmem>>, vector<32x128xbf16>
    %cst_61 = arith.constant dense<0.000000e+00> : vector<8x128xf32>
    %251 = tpu.matmul %248, %250, %cst_61 {dimension_numbers = #tpu.dot_dimension_numbers<[1], [0], [0], [1], [0, 0, 1, 1], [], []>} : vector<8x32xbf16>, vector<32x128xbf16>, vector<8x128xf32> -> vector<8x128xf32>
    %252 = arith.addf %249, %251 : vector<8x128xf32>
    %253 = vector.extract_strided_slice %252 {offsets = [0, 0], sizes = [8, 96], strides = [1, 1]} : vector<8x128xf32> to vector<8x96xf32>
    %254 = arith.negf %253 : vector<8x96xf32>
    %255 = math.exp %254 : vector<8x96xf32>
    %cst_62 = arith.constant 1.000000e+00 : f32
    %256 = vector.broadcast %cst_62 : f32 to vector<8x96xf32>
    %257 = arith.addf %256, %255 : vector<8x96xf32>
    %258 = arith.divf %256, %257 : vector<8x96xf32>
    %259 = vector.extract_strided_slice %252 {offsets = [0, 96], sizes = [8, 32], strides = [1, 1]} : vector<8x128xf32> to vector<8x32xf32>
    %260 = math.tanh %259 : vector<8x32xf32>
    %261 = vector.extract_strided_slice %258 {offsets = [0, 0], sizes = [8, 32], strides = [1, 1]} : vector<8x96xf32> to vector<8x32xf32>
    %262 = vector.extract_strided_slice %258 {offsets = [0, 32], sizes = [8, 32], strides = [1, 1]} : vector<8x96xf32> to vector<8x32xf32>
    %263 = vector.extract_strided_slice %258 {offsets = [0, 64], sizes = [8, 32], strides = [1, 1]} : vector<8x96xf32> to vector<8x32xf32>
    %264 = arith.mulf %262, %245 : vector<8x32xf32>
    %265 = arith.mulf %261, %260 : vector<8x32xf32>
    %266 = arith.addf %264, %265 : vector<8x32xf32>
    %267 = math.tanh %266 : vector<8x32xf32>
    %268 = arith.mulf %263, %267 : vector<8x32xf32>
    %269 = arith.truncf %268 : vector<8x32xf32> to vector<8x32xbf16>
    %270 = vector.extract_strided_slice %183 {offsets = [32, 0], sizes = [8, 128], strides = [1, 1]} : vector<64x128xf32> to vector<8x128xf32>
    %c0_63 = arith.constant 0 : index
    %c0_64 = arith.constant 0 : index
    %271 = vector.load %arg6[%c0_63, %c0_64] : memref<32x128xbf16, #tpu.memory_space<vmem>>, vector<32x128xbf16>
    %cst_65 = arith.constant dense<0.000000e+00> : vector<8x128xf32>
    %272 = tpu.matmul %269, %271, %cst_65 {dimension_numbers = #tpu.dot_dimension_numbers<[1], [0], [0], [1], [0, 0, 1, 1], [], []>} : vector<8x32xbf16>, vector<32x128xbf16>, vector<8x128xf32> -> vector<8x128xf32>
    %273 = arith.addf %270, %272 : vector<8x128xf32>
    %274 = vector.extract_strided_slice %273 {offsets = [0, 0], sizes = [8, 96], strides = [1, 1]} : vector<8x128xf32> to vector<8x96xf32>
    %275 = arith.negf %274 : vector<8x96xf32>
    %276 = math.exp %275 : vector<8x96xf32>
    %cst_66 = arith.constant 1.000000e+00 : f32
    %277 = vector.broadcast %cst_66 : f32 to vector<8x96xf32>
    %278 = arith.addf %277, %276 : vector<8x96xf32>
    %279 = arith.divf %277, %278 : vector<8x96xf32>
    %280 = vector.extract_strided_slice %273 {offsets = [0, 96], sizes = [8, 32], strides = [1, 1]} : vector<8x128xf32> to vector<8x32xf32>
    %281 = math.tanh %280 : vector<8x32xf32>
    %282 = vector.extract_strided_slice %279 {offsets = [0, 0], sizes = [8, 32], strides = [1, 1]} : vector<8x96xf32> to vector<8x32xf32>
    %283 = vector.extract_strided_slice %279 {offsets = [0, 32], sizes = [8, 32], strides = [1, 1]} : vector<8x96xf32> to vector<8x32xf32>
    %284 = vector.extract_strided_slice %279 {offsets = [0, 64], sizes = [8, 32], strides = [1, 1]} : vector<8x96xf32> to vector<8x32xf32>
    %285 = arith.mulf %283, %266 : vector<8x32xf32>
    %286 = arith.mulf %282, %281 : vector<8x32xf32>
    %287 = arith.addf %285, %286 : vector<8x32xf32>
    %288 = math.tanh %287 : vector<8x32xf32>
    %289 = arith.mulf %284, %288 : vector<8x32xf32>
    %290 = arith.truncf %289 : vector<8x32xf32> to vector<8x32xbf16>
    %291 = vector.extract_strided_slice %183 {offsets = [40, 0], sizes = [8, 128], strides = [1, 1]} : vector<64x128xf32> to vector<8x128xf32>
    %c0_67 = arith.constant 0 : index
    %c0_68 = arith.constant 0 : index
    %292 = vector.load %arg6[%c0_67, %c0_68] : memref<32x128xbf16, #tpu.memory_space<vmem>>, vector<32x128xbf16>
    %cst_69 = arith.constant dense<0.000000e+00> : vector<8x128xf32>
    %293 = tpu.matmul %290, %292, %cst_69 {dimension_numbers = #tpu.dot_dimension_numbers<[1], [0], [0], [1], [0, 0, 1, 1], [], []>} : vector<8x32xbf16>, vector<32x128xbf16>, vector<8x128xf32> -> vector<8x128xf32>
    %294 = arith.addf %291, %293 : vector<8x128xf32>
    %295 = vector.extract_strided_slice %294 {offsets = [0, 0], sizes = [8, 96], strides = [1, 1]} : vector<8x128xf32> to vector<8x96xf32>
    %296 = arith.negf %295 : vector<8x96xf32>
    %297 = math.exp %296 : vector<8x96xf32>
    %cst_70 = arith.constant 1.000000e+00 : f32
    %298 = vector.broadcast %cst_70 : f32 to vector<8x96xf32>
    %299 = arith.addf %298, %297 : vector<8x96xf32>
    %300 = arith.divf %298, %299 : vector<8x96xf32>
    %301 = vector.extract_strided_slice %294 {offsets = [0, 96], sizes = [8, 32], strides = [1, 1]} : vector<8x128xf32> to vector<8x32xf32>
    %302 = math.tanh %301 : vector<8x32xf32>
    %303 = vector.extract_strided_slice %300 {offsets = [0, 0], sizes = [8, 32], strides = [1, 1]} : vector<8x96xf32> to vector<8x32xf32>
    %304 = vector.extract_strided_slice %300 {offsets = [0, 32], sizes = [8, 32], strides = [1, 1]} : vector<8x96xf32> to vector<8x32xf32>
    %305 = vector.extract_strided_slice %300 {offsets = [0, 64], sizes = [8, 32], strides = [1, 1]} : vector<8x96xf32> to vector<8x32xf32>
    %306 = arith.mulf %304, %287 : vector<8x32xf32>
    %307 = arith.mulf %303, %302 : vector<8x32xf32>
    %308 = arith.addf %306, %307 : vector<8x32xf32>
    %309 = math.tanh %308 : vector<8x32xf32>
    %310 = arith.mulf %305, %309 : vector<8x32xf32>
    %311 = arith.truncf %310 : vector<8x32xf32> to vector<8x32xbf16>
    %312 = vector.extract_strided_slice %183 {offsets = [48, 0], sizes = [8, 128], strides = [1, 1]} : vector<64x128xf32> to vector<8x128xf32>
    %c0_71 = arith.constant 0 : index
    %c0_72 = arith.constant 0 : index
    %313 = vector.load %arg6[%c0_71, %c0_72] : memref<32x128xbf16, #tpu.memory_space<vmem>>, vector<32x128xbf16>
    %cst_73 = arith.constant dense<0.000000e+00> : vector<8x128xf32>
    %314 = tpu.matmul %311, %313, %cst_73 {dimension_numbers = #tpu.dot_dimension_numbers<[1], [0], [0], [1], [0, 0, 1, 1], [], []>} : vector<8x32xbf16>, vector<32x128xbf16>, vector<8x128xf32> -> vector<8x128xf32>
    %315 = arith.addf %312, %314 : vector<8x128xf32>
    %316 = vector.extract_strided_slice %315 {offsets = [0, 0], sizes = [8, 96], strides = [1, 1]} : vector<8x128xf32> to vector<8x96xf32>
    %317 = arith.negf %316 : vector<8x96xf32>
    %318 = math.exp %317 : vector<8x96xf32>
    %cst_74 = arith.constant 1.000000e+00 : f32
    %319 = vector.broadcast %cst_74 : f32 to vector<8x96xf32>
    %320 = arith.addf %319, %318 : vector<8x96xf32>
    %321 = arith.divf %319, %320 : vector<8x96xf32>
    %322 = vector.extract_strided_slice %315 {offsets = [0, 96], sizes = [8, 32], strides = [1, 1]} : vector<8x128xf32> to vector<8x32xf32>
    %323 = math.tanh %322 : vector<8x32xf32>
    %324 = vector.extract_strided_slice %321 {offsets = [0, 0], sizes = [8, 32], strides = [1, 1]} : vector<8x96xf32> to vector<8x32xf32>
    %325 = vector.extract_strided_slice %321 {offsets = [0, 32], sizes = [8, 32], strides = [1, 1]} : vector<8x96xf32> to vector<8x32xf32>
    %326 = vector.extract_strided_slice %321 {offsets = [0, 64], sizes = [8, 32], strides = [1, 1]} : vector<8x96xf32> to vector<8x32xf32>
    %327 = arith.mulf %325, %308 : vector<8x32xf32>
    %328 = arith.mulf %324, %323 : vector<8x32xf32>
    %329 = arith.addf %327, %328 : vector<8x32xf32>
    %330 = math.tanh %329 : vector<8x32xf32>
    %331 = arith.mulf %326, %330 : vector<8x32xf32>
    %332 = arith.truncf %331 : vector<8x32xf32> to vector<8x32xbf16>
    %333 = vector.extract_strided_slice %183 {offsets = [56, 0], sizes = [8, 128], strides = [1, 1]} : vector<64x128xf32> to vector<8x128xf32>
    %c0_75 = arith.constant 0 : index
    %c0_76 = arith.constant 0 : index
    %334 = vector.load %arg6[%c0_75, %c0_76] : memref<32x128xbf16, #tpu.memory_space<vmem>>, vector<32x128xbf16>
    %cst_77 = arith.constant dense<0.000000e+00> : vector<8x128xf32>
    %335 = tpu.matmul %332, %334, %cst_77 {dimension_numbers = #tpu.dot_dimension_numbers<[1], [0], [0], [1], [0, 0, 1, 1], [], []>} : vector<8x32xbf16>, vector<32x128xbf16>, vector<8x128xf32> -> vector<8x128xf32>
    %336 = arith.addf %333, %335 : vector<8x128xf32>
    %337 = vector.extract_strided_slice %336 {offsets = [0, 0], sizes = [8, 96], strides = [1, 1]} : vector<8x128xf32> to vector<8x96xf32>
    %338 = arith.negf %337 : vector<8x96xf32>
    %339 = math.exp %338 : vector<8x96xf32>
    %cst_78 = arith.constant 1.000000e+00 : f32
    %340 = vector.broadcast %cst_78 : f32 to vector<8x96xf32>
    %341 = arith.addf %340, %339 : vector<8x96xf32>
    %342 = arith.divf %340, %341 : vector<8x96xf32>
    %343 = vector.extract_strided_slice %336 {offsets = [0, 96], sizes = [8, 32], strides = [1, 1]} : vector<8x128xf32> to vector<8x32xf32>
    %344 = math.tanh %343 : vector<8x32xf32>
    %345 = vector.extract_strided_slice %342 {offsets = [0, 0], sizes = [8, 32], strides = [1, 1]} : vector<8x96xf32> to vector<8x32xf32>
    %346 = vector.extract_strided_slice %342 {offsets = [0, 32], sizes = [8, 32], strides = [1, 1]} : vector<8x96xf32> to vector<8x32xf32>
    %347 = arith.mulf %346, %329 : vector<8x32xf32>
    %348 = arith.mulf %345, %344 : vector<8x32xf32>
    %349 = arith.addf %347, %348 : vector<8x32xf32>
    %c0_79 = arith.constant 0 : index
    %c0_80 = arith.constant 0 : index
    %350 = vector.load %arg8[%c0_79, %c0_80] : memref<32x32xf32, #tpu.memory_space<vmem>>, vector<32x32xf32>
    %cst_81 = arith.constant dense<0.000000e+00> : vector<8x32xf32>
    %351 = tpu.matmul %349, %350, %cst_81 {dimension_numbers = #tpu.dot_dimension_numbers<[1], [0], [0], [1], [0, 0, 1, 1], [], []>} : vector<8x32xf32>, vector<32x32xf32>, vector<8x32xf32> -> vector<8x32xf32>
    %c0_82 = arith.constant 0 : index
    %c0_83 = arith.constant 0 : index
    %352 = vector.load %arg9[%c0_82, %c0_83] : memref<1x32xf32, #tpu.memory_space<vmem>>, vector<1x32xf32>
    %353 = vector.broadcast %352 : vector<1x32xf32> to vector<8x32xf32>
    %354 = arith.addf %351, %353 : vector<8x32xf32>
    %c0_84 = arith.constant 0 : index
    %c0_85 = arith.constant 0 : index
    %355 = vector.load %arg10[%c0_84, %c0_85] : memref<8x32xf32, #tpu.memory_space<vmem>>, vector<8x32xf32>
    tpu.vector_store %arg10[%c0_84, %c0_85], %354 {strides = array<i32>} : memref<8x32xf32, #tpu.memory_space<vmem>>, vector<8x32xf32>,
    return
  }
  func.func @transform_0(%arg0: i32) -> (i32, i32, i32) {
    %c0_i32 = arith.constant 0 : i32
    %c0_i32_0 = arith.constant 0 : i32
    %c0_i32_1 = arith.constant 0 : i32
    return %c0_i32, %arg0, %c0_i32_0 : i32, i32, i32
  }
  func.func @transform_1(%arg0: i32) -> (i32, i32) {
    %c0_i32 = arith.constant 0 : i32
    %c0_i32_0 = arith.constant 0 : i32
    %c0_i32_1 = arith.constant 0 : i32
    return %c0_i32, %c0_i32_0 : i32, i32
  }
  func.func @transform_2(%arg0: i32) -> (i32, i32) {
    %c0_i32 = arith.constant 0 : i32
    %c0_i32_0 = arith.constant 0 : i32
    %c0_i32_1 = arith.constant 0 : i32
    return %c0_i32, %c0_i32_0 : i32, i32
  }
  func.func @transform_3(%arg0: i32) -> (i32, i32) {
    %c0_i32 = arith.constant 0 : i32
    %c0_i32_0 = arith.constant 0 : i32
    %c0_i32_1 = arith.constant 0 : i32
    return %c0_i32, %c0_i32_0 : i32, i32
  }
  func.func @transform_4(%arg0: i32) -> (i32, i32) {
    %c0_i32 = arith.constant 0 : i32
    %c0_i32_0 = arith.constant 0 : i32
    %c0_i32_1 = arith.constant 0 : i32
    return %c0_i32, %c0_i32_0 : i32, i32
  }
  func.func @transform_5(%arg0: i32) -> (i32, i32) {
    %c0_i32 = arith.constant 0 : i32
    %c0_i32_0 = arith.constant 0 : i32
    %c0_i32_1 = arith.constant 0 : i32
    return %c0_i32, %c0_i32_0 : i32, i32
  }
  func.func @transform_6(%arg0: i32) -> (i32, i32) {
    %c0_i32 = arith.constant 0 : i32
    %c0_i32_0 = arith.constant 0 : i32
    %c0_i32_1 = arith.constant 0 : i32
    return %c0_i32, %c0_i32_0 : i32, i32
  }
  func.func @transform_7(%arg0: i32) -> (i32, i32) {
    %c0_i32 = arith.constant 0 : i32
    %c0_i32_0 = arith.constant 0 : i32
    %c0_i32_1 = arith.constant 0 : i32
    return %c0_i32, %c0_i32_0 : i32, i32
  }
  func.func @transform_8(%arg0: i32) -> (i32, i32) {
    %c0_i32 = arith.constant 0 : i32
    %c0_i32_0 = arith.constant 0 : i32
    %c0_i32_1 = arith.constant 0 : i32
    return %c0_i32, %c0_i32_0 : i32, i32
  }
  func.func @transform_9(%arg0: i32) -> (i32, i32) {
    %c0_i32 = arith.constant 0 : i32
    %c0_i32_0 = arith.constant 0 : i32
    return %arg0, %c0_i32 : i32, i32
  }
}

</mosaic_0001>

<llo_original>
// kernel: tpu_custom_call.1
$region0: #{tpu_custom_call.1}
  #allocation0 [shape = 'u32[]', space=smem, size = 0x4, offset = 0x4, fixed_abs, tag = 'smem constant byte address 0x4 - core index']
  #allocation1 [shape = 'u32[144,128]{1,0:T(1,128)}', space=vmem, size = 0x12000, scoped, tag = 'internal scratch']
  %s0 = inlined_call_operand.hbm [shape: f32[8,8,64], index: 0, kind: input, shape index: {}]
  %s1 = inlined_call_operand.hbm [shape: bf16[64,128], index: 1, kind: input, shape index: {}]
  %s2 = inlined_call_operand.hbm [shape: bf16[32,128], index: 2, kind: input, shape index: {}]
  %s3 = inlined_call_operand.vmem [shape: f32[1,128], index: 3, kind: input, shape index: {}]
  %s4 = inlined_call_operand.hbm [shape: bf16[32,128], index: 4, kind: input, shape index: {}]
  %s5 = inlined_call_operand.vmem [shape: bf16[32,128], index: 5, kind: input, shape index: {}]
  %s6 = inlined_call_operand.vmem [shape: f32[1,128], index: 6, kind: input, shape index: {}]
  %s7 = inlined_call_operand.hbm [shape: f32[32,32], index: 7, kind: input, shape index: {}]
  %s8 = inlined_call_operand.vmem [shape: f32[1,32], index: 8, kind: input, shape index: {}]
  %s9 = inlined_call_operand.hbm [shape: f32[8,32], index: 9, kind: output, shape index: {}]
  %s10 = sld [smem:[#allocation0]]
  $region66: #{tpu_custom_call.1} parent=0
    _
  %s12 = ssub.s32 1, %s10
  %s13 = scalar_select 0, %s12, %s10
  $region1: #{tpu_custom_call.1} parent=0
    #allocation2 [shape = 'u8[32768]{0}', space=vmem, size = 0x8000, scoped, tag = 'input window, operand 0, single buffered']
    #allocation3 [shape = 's32[1]{0}', space=sflag, size = 0x4, scoped, tag = 'scoped memory for tpu_custom_call.1']
    #allocation4 [shape = 's32[1]{0}', space=sflag, size = 0x4, scoped, tag = 'scoped memory for tpu_custom_call.1']
    #allocation5 [shape = 'u8[16384]{0}', space=vmem, size = 0x4000, scoped, tag = 'input window, operand 1, single buffered']
    #allocation6 [shape = 's32[1]{0}', space=sflag, size = 0x4, scoped, tag = 'scoped memory for tpu_custom_call.1']
    #allocation7 [shape = 'u8[8192]{0}', space=vmem, size = 0x2000, scoped, tag = 'input window, operand 2, single buffered']
    #allocation8 [shape = 'u8[8192]{0}', space=vmem, size = 0x2000, scoped, tag = 'input window, operand 4, single buffered']
    #allocation9 [shape = 's32[1]{0}', space=sflag, size = 0x4, scoped, tag = 'scoped memory for tpu_custom_call.1']
    #allocation10 [shape = 'u8[16384]{0}', space=vmem, size = 0x4000, scoped, tag = 'input window, operand 7, single buffered']
    #allocation11 [shape = 'u8[4096]{0}', space=vmem, size = 0x1000, scoped, tag = 'output window, operand 0, single buffered']
    %14 = vsyncpa [#allocation3], 0
    %15 = vsyncpa [#allocation6], 0
    %16 = vsyncpa [#allocation9], 0
    %17 = vsyncpa [#allocation4], 0
    // Predicated region
    $region2: #{tpu_custom_call.1} parent=1 // pred_check
      _
    $region3: #{tpu_custom_call.1} parent=1 // pred_check_branch
      %19 = sbr.rel (0) target = $region5
    $region4: #{tpu_custom_call.1} parent=1 // pred_region
      %s21 = ssub.s32 1024, 1024
      %22 = vsyncadd [#allocation3], %s21
      %s23 = sshll.u32 [#allocation2], 4
      %s24 = int_to_ptr.vmem [resolvable:$true] %s23
      %29 = dma.hbm_to_vmem [thread:$0]  %s0, 1024, %s24, [#allocation3], 128, 128, 8
    $region5: #{tpu_custom_call.1} parent=1 // pred_fallthru
      _
    // Predicated region
    $region6: #{tpu_custom_call.1} parent=1 // pred_check
      _
    $region7: #{tpu_custom_call.1} parent=1 // pred_check_branch
      %31 = sbr.rel (0) target = $region9
    $region8: #{tpu_custom_call.1} parent=1 // pred_region
      %s33 = ssub.s32 512, 512
      %34 = vsyncadd [#allocation6], %s33
      %s35 = sshll.u32 [#allocation5], 4
      %s36 = int_to_ptr.vmem [resolvable:$true] %s35
      %41 = dma.hbm_to_vmem [thread:$0]  %s1, 512, %s36, [#allocation6], 64, 64, 4
    $region9: #{tpu_custom_call.1} parent=1 // pred_fallthru
      _
    // Predicated region
    $region10: #{tpu_custom_call.1} parent=1 // pred_check
      _
    $region11: #{tpu_custom_call.1} parent=1 // pred_check_branch
      %43 = sbr.rel (0) target = $region13
    $region12: #{tpu_custom_call.1} parent=1 // pred_region
      %s45 = ssub.s32 256, 256
      %46 = vsyncadd [#allocation6], %s45
      %s47 = sshll.u32 [#allocation7], 4
      %s48 = int_to_ptr.vmem [resolvable:$true] %s47
      %53 = dma.hbm_to_vmem [thread:$0]  %s2, 256, %s48, [#allocation6], 64, 64, 4
    $region13: #{tpu_custom_call.1} parent=1 // pred_fallthru
      _
    // Predicated region
    $region14: #{tpu_custom_call.1} parent=1 // pred_check
      _
    $region15: #{tpu_custom_call.1} parent=1 // pred_check_branch
      %55 = sbr.rel (0) target = $region17
    $region16: #{tpu_custom_call.1} parent=1 // pred_region
      _
    $region17: #{tpu_custom_call.1} parent=1 // pred_fallthru
      _
    // Predicated region
    $region18: #{tpu_custom_call.1} parent=1 // pred_check
      _
    $region19: #{tpu_custom_call.1} parent=1 // pred_check_branch
      %57 = sbr.rel (0) target = $region21
    $region20: #{tpu_custom_call.1} parent=1 // pred_region
      %s59 = ssub.s32 256, 256
      %60 = vsyncadd [#allocation9], %s59
      %s61 = sshll.u32 [#allocation8], 4
      %s62 = int_to_ptr.vmem [resolvable:$true] %s61
      %67 = dma.hbm_to_vmem [thread:$0]  %s4, 256, %s62, [#allocation9], 64, 64, 4
    $region21: #{tpu_custom_call.1} parent=1 // pred_fallthru
      _
    // Predicated region
    $region22: #{tpu_custom_call.1} parent=1 // pred_check
      _
    $region23: #{tpu_custom_call.1} parent=1 // pred_check_branch
      %69 = sbr.rel (0) target = $region25
    $region24: #{tpu_custom_call.1} parent=1 // pred_region
      _
    $region25: #{tpu_custom_call.1} parent=1 // pred_fallthru
      _
    // Predicated region
    $region26: #{tpu_custom_call.1} parent=1 // pred_check
      _
    $region27: #{tpu_custom_call.1} parent=1 // pred_check_branch
      %71 = sbr.rel (0) target = $region29
    $region28: #{tpu_custom_call.1} parent=1 // pred_region
      _
    $region29: #{tpu_custom_call.1} parent=1 // pred_fallthru
      _
    // Predicated region
    $region30: #{tpu_custom_call.1} parent=1 // pred_check
      _
    $region31: #{tpu_custom_call.1} parent=1 // pred_check_branch
      %73 = sbr.rel (0) target = $region33
    $region32: #{tpu_custom_call.1} parent=1 // pred_region
      %s75 = ssub.s32 512, 512
      %76 = vsyncadd [#allocation9], %s75
      %s77 = sshll.u32 [#allocation10], 4
      %s78 = int_to_ptr.vmem [resolvable:$true] %s77
      %83 = dma.hbm_to_vmem [thread:$0]  %s7, 512, %s78, [#allocation9], 128, 128, 8
    $region33: #{tpu_custom_call.1} parent=1 // pred_fallthru
      _
    // Predicated region
    $region34: #{tpu_custom_call.1} parent=1 // pred_check
      _
    $region35: #{tpu_custom_call.1} parent=1 // pred_check_branch
      %85 = sbr.rel (0) target = $region37
    $region36: #{tpu_custom_call.1} parent=1 // pred_region
      _
    $region37: #{tpu_custom_call.1} parent=1 // pred_fallthru
      _
    // Predicated region
    $region38: #{tpu_custom_call.1} parent=1 // pred_check
      _
    $region39: #{tpu_custom_call.1} parent=1 // pred_check_branch
      %87 = sbr.rel (0) target = $region41
    $region40: #{tpu_custom_call.1} parent=1 // pred_region
      %88 = dma.done [#allocation3], 1024
    $region41: #{tpu_custom_call.1} parent=1 // pred_fallthru
      _
    // Predicated region
    $region42: #{tpu_custom_call.1} parent=1 // pred_check
      _
    $region43: #{tpu_custom_call.1} parent=1 // pred_check_branch
      %90 = sbr.rel (0) target = $region45
    $region44: #{tpu_custom_call.1} parent=1 // pred_region
      %91 = dma.done [#allocation6], 512
    $region45: #{tpu_custom_call.1} parent=1 // pred_fallthru
      _
    // Predicated region
    $region46: #{tpu_custom_call.1} parent=1 // pred_check
      _
    $region47: #{tpu_custom_call.1} parent=1 // pred_check_branch
      %93 = sbr.rel (0) target = $region49
    $region48: #{tpu_custom_call.1} parent=1 // pred_region
      %94 = dma.done [#allocation6], 256
    $region49: #{tpu_custom_call.1} parent=1 // pred_fallthru
      _
    // Predicated region
    $region50: #{tpu_custom_call.1} parent=1 // pred_check
      _
    $region51: #{tpu_custom_call.1} parent=1 // pred_check_branch
      %96 = sbr.rel (0) target = $region53
    $region52: #{tpu_custom_call.1} parent=1 // pred_region
      %97 = dma.done [#allocation9], 256
    $region53: #{tpu_custom_call.1} parent=1 // pred_fallthru
      _
    // Predicated region
    $region54: #{tpu_custom_call.1} parent=1 // pred_check
      _
    $region55: #{tpu_custom_call.1} parent=1 // pred_check_branch
      %99 = sbr.rel (0) target = $region57
    $region56: #{tpu_custom_call.1} parent=1 // pred_region
      %100 = dma.done [#allocation9], 512
    $region57: #{tpu_custom_call.1} parent=1 // pred_fallthru
      _
    %v102 = vld [vmem:[#allocation2] sm:$0xff]
    %v103 = vld [vmem:[#allocation2 + $0x8] sm:$0xff]
    %v104 = vld [vmem:[#allocation2 + $0x10] sm:$0xff]
    %v105 = vld [vmem:[#allocation2 + $0x18] sm:$0xff]
    %v106 = vld [vmem:[#allocation2 + $0x20] sm:$0xff]
    %v107 = vld [vmem:[#allocation2 + $0x28] sm:$0xff]
    %v108 = vld [vmem:[#allocation2 + $0x30] sm:$0xff]
    %v109 = vld [vmem:[#allocation2 + $0x38] sm:$0xff]
    %v110 = vpack.c.bf16 %v103, %v102
    %v111 = vpack.c.bf16 %v105, %v104
    %v112 = vpack.c.bf16 %v107, %v106
    %v113 = vpack.c.bf16 %v109, %v108
    %v114 = vld [vmem:[#allocation5] sm:$0xf]
    %v115 = vld [vmem:[#allocation5 + $0x4] sm:$0xf]
    %v116 = vld [vmem:[#allocation5 + $0x8] sm:$0xf]
    %v117 = vld [vmem:[#allocation5 + $0xc] sm:$0xf]
    %v118 = vld [vmem:[#allocation5 + $0x10] sm:$0xf]
    %v119 = vld [vmem:[#allocation5 + $0x14] sm:$0xf]
    %v120 = vld [vmem:[#allocation5 + $0x18] sm:$0xf]
    %v121 = vld [vmem:[#allocation5 + $0x1c] sm:$0xf]
    %v122 = vld [vmem:[%s3] sm:$0x1]
    %v124 = vlaneseq
    %v125 = vshrl.u32 %v124, 7
    %v126 = vsub.s32 0, %v125
    %v127 = vrot.slane %v122, %v126
    %v137 = vunpack.c.l.b16 %v114
    %v138 = vunpack.c.l.b16 %v115
    %v139 = vunpack.c.l.b16 %v116
    %v140 = vunpack.c.l.b16 %v117
    %v141 = vunpack.c.l.b16 %v118
    %v142 = vunpack.c.l.b16 %v119
    %v143 = vunpack.c.l.b16 %v120
    %v144 = vunpack.c.l.b16 %v121
    %v145 = vpack.c.b16 %v138, %v137
    %v146 = vpack.c.b16 %v140, %v139
    %v147 = vpack.c.b16 %v142, %v141
    %v148 = vpack.c.b16 %v144, %v143
    %vm153 = vcmask 523264
    %v155 = vsel %vm153, %v110, 0
    %v158 = vsel %vm153, %v111, 0
    %v161 = vsel %vm153, %v112, 0
    %v164 = vsel %vm153, %v113, 0
    %166 = vmatprep.subr.bf16.mxu0 0
    %167 = vmatpush1.bf16.msra.mxu0 %v145
    %168 = vmatprep.subr.bf16.mxu0 0
    %169 = vmatpush1.bf16.msra.mxu0 %v146
    %170 = vmatprep.subr.bf16.mxu0 0
    %171 = vmatpush1.bf16.msra.mxu0 %v147
    %172 = vmatprep.subr.bf16.mxu0 0
    %173 = vmatpush1.bf16.msra.mxu0 %v148
    %174 = vmatprep.subr.bf16.mxu0 0
    %175 = vmatpush1.bf16.msra.mxu0 0
    %176 = vmatprep.subr.bf16.mxu0 0
    %177 = vmatpush1.bf16.msra.mxu0 0
    %178 = vmatprep.subr.bf16.mxu0 0
    %179 = vmatpush1.bf16.msra.mxu0 0
    %180 = vmatprep.subr.bf16.mxu0 0
    %181 = vmatpush1.bf16.msra.mxu0 0
    %182 = vmatprep.subr.bf16.mxu0 0
    %183 = vmatpush1.bf16.msra.mxu0 0
    %184 = vmatprep.subr.bf16.mxu0 0
    %185 = vmatpush1.bf16.msra.mxu0 0
    %186 = vmatprep.subr.bf16.mxu0 0
    %187 = vmatpush1.bf16.msra.mxu0 0
    %188 = vmatprep.subr.bf16.mxu0 0
    %189 = vmatpush1.bf16.msra.mxu0 0
    %190 = vmatprep.subr.bf16.mxu0 0
    %191 = vmatpush1.bf16.msra.mxu0 0
    %192 = vmatprep.subr.bf16.mxu0 0
    %193 = vmatpush1.bf16.msra.mxu0 0
    %194 = vmatprep.subr.bf16.mxu0 0
    %195 = vmatpush1.bf16.msra.mxu0 0
    %196 = vmatprep.subr.bf16.mxu0 0
    %197 = vmatpush1.bf16.msra.mxu0 0
    %198 = vmatprep.mubr.bf16.mxu0 0
    %199 = vmatmul.mubr.bf16.gmra.mrb[0].mxu0 %v155
    %v200 = vpop.f32.mrb[0].mxu0
    %v201 = vadd.f32 %v127, %v200
    %v202 = vpop.f32.mrb[0].mxu0
    %v203 = vpop.f32.mrb[0].mxu0
    %v204 = vadd.f32 %v127, %v203
    %v205 = vpop.f32.mrb[0].mxu0
    %206 = vmatprep.mubr.bf16.mxu0 0
    %207 = vmatmul.mubr.bf16.gmra.mrb[0].mxu0 %v158
    %v208 = vpop.f32.mrb[0].mxu0
    %v209 = vadd.f32 %v127, %v208
    %v210 = vpop.f32.mrb[0].mxu0
    %v211 = vpop.f32.mrb[0].mxu0
    %v212 = vadd.f32 %v127, %v211
    %v213 = vpop.f32.mrb[0].mxu0
    %214 = vmatprep.mubr.bf16.mxu0 0
    %215 = vmatmul.mubr.bf16.gmra.mrb[0].mxu0 %v161
    %v216 = vpop.f32.mrb[0].mxu0
    %v217 = vadd.f32 %v127, %v216
    %v218 = vpop.f32.mrb[0].mxu0
    %v219 = vpop.f32.mrb[0].mxu0
    %v220 = vadd.f32 %v127, %v219
    %v221 = vpop.f32.mrb[0].mxu0
    %222 = vmatprep.mubr.bf16.mxu0 0
    %223 = vmatmul.mubr.bf16.gmra.mrb[0].mxu0 %v164
    %v224 = vpop.f32.mrb[0].mxu0
    %v225 = vadd.f32 %v127, %v224
    %v226 = vpop.f32.mrb[0].mxu0
    %v227 = vpop.f32.mrb[0].mxu0
    %v228 = vadd.f32 %v127, %v227
    %v229 = vpop.f32.mrb[0].mxu0
    %230 = vdwg.mxu0
    %v231 = vld [vmem:[#allocation7] sm:$0xf]
    %v232 = vld [vmem:[#allocation7 + $0x4] sm:$0xf]
    %v233 = vld [vmem:[#allocation7 + $0x8] sm:$0xf]
    %v234 = vld [vmem:[#allocation7 + $0xc] sm:$0xf]
    %v239 = vunpack.c.l.b16 %v231
    %v240 = vunpack.c.l.b16 %v232
    %v241 = vunpack.c.l.b16 %v233
    %v242 = vunpack.c.l.b16 %v234
    %v243 = vpack.c.b16 %v240, %v239
    %v244 = vpack.c.b16 %v242, %v241
    %vm247 = vcmask 261120
    %v249 = vsel %vm247, 0, 0
    %251 = vmatprep.subr.bf16.mxu0 0
    %252 = vmatpush1.bf16.msra.mxu0 %v243
    %253 = vmatprep.subr.bf16.mxu0 0
    %254 = vmatpush1.bf16.msra.mxu0 %v244
    %255 = vmatprep.subr.bf16.mxu0 0
    %256 = vmatpush1.bf16.msra.mxu0 0
    %257 = vmatprep.subr.bf16.mxu0 0
    %258 = vmatpush1.bf16.msra.mxu0 0
    %259 = vmatprep.subr.bf16.mxu0 0
    %260 = vmatpush1.bf16.msra.mxu0 0
    %261 = vmatprep.subr.bf16.mxu0 0
    %262 = vmatpush1.bf16.msra.mxu0 0
    %263 = vmatprep.subr.bf16.mxu0 0
    %264 = vmatpush1.bf16.msra.mxu0 0
    %265 = vmatprep.subr.bf16.mxu0 0
    %266 = vmatpush1.bf16.msra.mxu0 0
    %267 = vmatprep.subr.bf16.mxu0 0
    %268 = vmatpush1.bf16.msra.mxu0 0
    %269 = vmatprep.subr.bf16.mxu0 0
    %270 = vmatpush1.bf16.msra.mxu0 0
    %271 = vmatprep.subr.bf16.mxu0 0
    %272 = vmatpush1.bf16.msra.mxu0 0
    %273 = vmatprep.subr.bf16.mxu0 0
    %274 = vmatpush1.bf16.msra.mxu0 0
    %275 = vmatprep.subr.bf16.mxu0 0
    %276 = vmatpush1.bf16.msra.mxu0 0
    %277 = vmatprep.subr.bf16.mxu0 0
    %278 = vmatpush1.bf16.msra.mxu0 0
    %279 = vmatprep.subr.bf16.mxu0 0
    %280 = vmatpush1.bf16.msra.mxu0 0
    %281 = vmatprep.subr.bf16.mxu0 0
    %282 = vmatpush1.bf16.msra.mxu0 0
    %283 = vmatprep.mubr.bf16.mxu0 0
    %284 = vmatmul.mubr.bf16.gmra.mrb[0].mxu0 %v249
    %v285 = vpop.f32.mrb[0].mxu0
    %v286 = vadd.f32 0.0, %v285
    %v287 = vpop.f32.mrb[0].mxu0
    %v288 = vpop.f32.mrb[0].mxu0
    %v289 = vpop.f32.mrb[0].mxu0
    %290 = vdwg.mxu0
    %v291 = vadd.f32 %v201, %v286
    %v292 = vxor.u32 %v291, 2147483648
    %v293 = vmul.f32 %v292, 1.442695
    %v294 = vpow.pop %v293
    %v295 = vadd.f32 %v294, 1.0
    %v296 = vrcp.pop %v295
    %v297 = vmul.f32 1.0, %v296
    %v298 = vtanh.pop %v291
    %v299 = vmul.f32 %v297, 0.0
    %301 = vrot.lane.b32.xlu0 %v298, 32
    %v302 = vpop.permute.xlu0 %301
    %v304 = vmul.f32 %v297, %v302
    %306 = vrot.lane.b32.xlu0 %v304, 32
    %v307 = vpop.permute.xlu0 %306
    %v309 = vadd.f32 %v299, %v307
    %v310 = vtanh.pop %v309
    %312 = vrot.lane.b32.xlu0 %v310, 32
    %v313 = vpop.permute.xlu0 %312
    %v315 = vmul.f32 %v297, %v313
    %v316 = vpack.c.bf16 %v315, %v315
    %318 = vrot.lane.b32.xlu0 %v316, 64
    %v319 = vpop.permute.xlu0 %318
    %v321 = vsel %vm247, %v319, 0
    %323 = vmatprep.subr.bf16.mxu0 0
    %324 = vmatpush1.bf16.msra.mxu0 %v243
    %325 = vmatprep.subr.bf16.mxu0 0
    %326 = vmatpush1.bf16.msra.mxu0 %v244
    %327 = vmatprep.subr.bf16.mxu0 0
    %328 = vmatpush1.bf16.msra.mxu0 0
    %329 = vmatprep.subr.bf16.mxu0 0
    %330 = vmatpush1.bf16.msra.mxu0 0
    %331 = vmatprep.subr.bf16.mxu0 0
    %332 = vmatpush1.bf16.msra.mxu0 0
    %333 = vmatprep.subr.bf16.mxu0 0
    %334 = vmatpush1.bf16.msra.mxu0 0
    %335 = vmatprep.subr.bf16.mxu0 0
    %336 = vmatpush1.bf16.msra.mxu0 0
    %337 = vmatprep.subr.bf16.mxu0 0
    %338 = vmatpush1.bf16.msra.mxu0 0
    %339 = vmatprep.subr.bf16.mxu0 0
    %340 = vmatpush1.bf16.msra.mxu0 0
    %341 = vmatprep.subr.bf16.mxu0 0
    %342 = vmatpush1.bf16.msra.mxu0 0
    %343 = vmatprep.subr.bf16.mxu0 0
    %344 = vmatpush1.bf16.msra.mxu0 0
    %345 = vmatprep.subr.bf16.mxu0 0
    %346 = vmatpush1.bf16.msra.mxu0 0
    %347 = vmatprep.subr.bf16.mxu0 0
    %348 = vmatpush1.bf16.msra.mxu0 0
    %349 = vmatprep.subr.bf16.mxu0 0
    %350 = vmatpush1.bf16.msra.mxu0 0
    %351 = vmatprep.subr.bf16.mxu0 0
    %352 = vmatpush1.bf16.msra.mxu0 0
    %353 = vmatprep.subr.bf16.mxu0 0
    %354 = vmatpush1.bf16.msra.mxu0 0
    %355 = vmatprep.mubr.bf16.mxu0 0
    %356 = vmatmul.mubr.bf16.gmra.mrb[0].mxu0 %v321
    %v357 = vpop.f32.mrb[0].mxu0
    %v358 = vadd.f32 0.0, %v357
    %v359 = vpop.f32.mrb[0].mxu0
    %v360 = vpop.f32.mrb[0].mxu0
    %v361 = vpop.f32.mrb[0].mxu0
    %362 = vdwg.mxu0
    %v363 = vadd.f32 %v204, %v358
    %v364 = vxor.u32 %v363, 2147483648
    %v365 = vmul.f32 %v364, 1.442695
    %v366 = vpow.pop %v365
    %v367 = vadd.f32 %v366, 1.0
    %v368 = vrcp.pop %v367
    %v369 = vmul.f32 1.0, %v368
    %v370 = vtanh.pop %v363
    %v371 = vmul.f32 %v369, %v309
    %373 = vrot.lane.b32.xlu0 %v370, 32
    %v374 = vpop.permute.xlu0 %373
    %v376 = vmul.f32 %v369, %v374
    %378 = vrot.lane.b32.xlu0 %v376, 32
    %v379 = vpop.permute.xlu0 %378
    %v381 = vadd.f32 %v371, %v379
    %v382 = vtanh.pop %v381
    %384 = vrot.lane.b32.xlu0 %v382, 32
    %v385 = vpop.permute.xlu0 %384
    %v387 = vmul.f32 %v369, %v385
    %v388 = vpack.c.bf16 %v387, %v387
    %390 = vrot.lane.b32.xlu0 %v388, 64
    %v391 = vpop.permute.xlu0 %390
    %v393 = vsel %vm247, %v391, 0
    %395 = vmatprep.subr.bf16.mxu0 0
    %396 = vmatpush1.bf16.msra.mxu0 %v243
    %397 = vmatprep.subr.bf16.mxu0 0
    %398 = vmatpush1.bf16.msra.mxu0 %v244
    %399 = vmatprep.subr.bf16.mxu0 0
    %400 = vmatpush1.bf16.msra.mxu0 0
    %401 = vmatprep.subr.bf16.mxu0 0
    %402 = vmatpush1.bf16.msra.mxu0 0
    %403 = vmatprep.subr.bf16.mxu0 0
    %404 = vmatpush1.bf16.msra.mxu0 0
    %405 = vmatprep.subr.bf16.mxu0 0
    %406 = vmatpush1.bf16.msra.mxu0 0
    %407 = vmatprep.subr.bf16.mxu0 0
    %408 = vmatpush1.bf16.msra.mxu0 0
    %409 = vmatprep.subr.bf16.mxu0 0
    %410 = vmatpush1.bf16.msra.mxu0 0
    %411 = vmatprep.subr.bf16.mxu0 0
    %412 = vmatpush1.bf16.msra.mxu0 0
    %413 = vmatprep.subr.bf16.mxu0 0
    %414 = vmatpush1.bf16.msra.mxu0 0
    %415 = vmatprep.subr.bf16.mxu0 0
    %416 = vmatpush1.bf16.msra.mxu0 0
    %417 = vmatprep.subr.bf16.mxu0 0
    %418 = vmatpush1.bf16.msra.mxu0 0
    %419 = vmatprep.subr.bf16.mxu0 0
    %420 = vmatpush1.bf16.msra.mxu0 0
    %421 = vmatprep.subr.bf16.mxu0 0
    %422 = vmatpush1.bf16.msra.mxu0 0
    %423 = vmatprep.subr.bf16.mxu0 0
    %424 = vmatpush1.bf16.msra.mxu0 0
    %425 = vmatprep.subr.bf16.mxu0 0
    %426 = vmatpush1.bf16.msra.mxu0 0
    %427 = vmatprep.mubr.bf16.mxu0 0
    %428 = vmatmul.mubr.bf16.gmra.mrb[0].mxu0 %v393
    %v429 = vpop.f32.mrb[0].mxu0
    %v430 = vadd.f32 0.0, %v429
    %v431 = vpop.f32.mrb[0].mxu0
    %v432 = vpop.f32.mrb[0].mxu0
    %v433 = vpop.f32.mrb[0].mxu0
    %434 = vdwg.mxu0
    %v435 = vadd.f32 %v209, %v430
    %v436 = vxor.u32 %v435, 2147483648
    %v437 = vmul.f32 %v436, 1.442695
    %v438 = vpow.pop %v437
    %v439 = vadd.f32 %v438, 1.0
    %v440 = vrcp.pop %v439
    %v441 = vmul.f32 1.0, %v440
    %v442 = vtanh.pop %v435
    %v443 = vmul.f32 %v441, %v381
    %445 = vrot.lane.b32.xlu0 %v442, 32
    %v446 = vpop.permute.xlu0 %445
    %v448 = vmul.f32 %v441, %v446
    %450 = vrot.lane.b32.xlu0 %v448, 32
    %v451 = vpop.permute.xlu0 %450
    %v453 = vadd.f32 %v443, %v451
    %v454 = vtanh.pop %v453
    %456 = vrot.lane.b32.xlu0 %v454, 32
    %v457 = vpop.permute.xlu0 %456
    %v459 = vmul.f32 %v441, %v457
    %v460 = vpack.c.bf16 %v459, %v459
    %462 = vrot.lane.b32.xlu0 %v460, 64
    %v463 = vpop.permute.xlu0 %462
    %v465 = vsel %vm247, %v463, 0
    %467 = vmatprep.subr.bf16.mxu0 0
    %468 = vmatpush1.bf16.msra.mxu0 %v243
    %469 = vmatprep.subr.bf16.mxu0 0
    %470 = vmatpush1.bf16.msra.mxu0 %v244
    %471 = vmatprep.subr.bf16.mxu0 0
    %472 = vmatpush1.bf16.msra.mxu0 0
    %473 = vmatprep.subr.bf16.mxu0 0
    %474 = vmatpush1.bf16.msra.mxu0 0
    %475 = vmatprep.subr.bf16.mxu0 0
    %476 = vmatpush1.bf16.msra.mxu0 0
    %477 = vmatprep.subr.bf16.mxu0 0
    %478 = vmatpush1.bf16.msra.mxu0 0
    %479 = vmatprep.subr.bf16.mxu0 0
    %480 = vmatpush1.bf16.msra.mxu0 0
    %481 = vmatprep.subr.bf16.mxu0 0
    %482 = vmatpush1.bf16.msra.mxu0 0
    %483 = vmatprep.subr.bf16.mxu0 0
    %484 = vmatpush1.bf16.msra.mxu0 0
    %485 = vmatprep.subr.bf16.mxu0 0
    %486 = vmatpush1.bf16.msra.mxu0 0
    %487 = vmatprep.subr.bf16.mxu0 0
    %488 = vmatpush1.bf16.msra.mxu0 0
    %489 = vmatprep.subr.bf16.mxu0 0
    %490 = vmatpush1.bf16.msra.mxu0 0
    %491 = vmatprep.subr.bf16.mxu0 0
    %492 = vmatpush1.bf16.msra.mxu0 0
    %493 = vmatprep.subr.bf16.mxu0 0
    %494 = vmatpush1.bf16.msra.mxu0 0
    %495 = vmatprep.subr.bf16.mxu0 0
    %496 = vmatpush1.bf16.msra.mxu0 0
    %497 = vmatprep.subr.bf16.mxu0 0
    %498 = vmatpush1.bf16.msra.mxu0 0
    %499 = vmatprep.mubr.bf16.mxu0 0
    %500 = vmatmul.mubr.bf16.gmra.mrb[0].mxu0 %v465
    %v501 = vpop.f32.mrb[0].mxu0
    %v502 = vadd.f32 0.0, %v501
    %v503 = vpop.f32.mrb[0].mxu0
    %v504 = vpop.f32.mrb[0].mxu0
    %v505 = vpop.f32.mrb[0].mxu0
    %506 = vdwg.mxu0
    %v507 = vadd.f32 %v212, %v502
    %v508 = vxor.u32 %v507, 2147483648
    %v509 = vmul.f32 %v508, 1.442695
    %v510 = vpow.pop %v509
    %v511 = vadd.f32 %v510, 1.0
    %v512 = vrcp.pop %v511
    %v513 = vmul.f32 1.0, %v512
    %v514 = vtanh.pop %v507
    %v515 = vmul.f32 %v513, %v453
    %517 = vrot.lane.b32.xlu0 %v514, 32
    %v518 = vpop.permute.xlu0 %517
    %v520 = vmul.f32 %v513, %v518
    %522 = vrot.lane.b32.xlu0 %v520, 32
    %v523 = vpop.permute.xlu0 %522
    %v525 = vadd.f32 %v515, %v523
    %v526 = vtanh.pop %v525
    %528 = vrot.lane.b32.xlu0 %v526, 32
    %v529 = vpop.permute.xlu0 %528
    %v531 = vmul.f32 %v513, %v529
    %v532 = vpack.c.bf16 %v531, %v531
    %534 = vrot.lane.b32.xlu0 %v532, 64
    %v535 = vpop.permute.xlu0 %534
    %v537 = vsel %vm247, %v535, 0
    %539 = vmatprep.subr.bf16.mxu0 0
    %540 = vmatpush1.bf16.msra.mxu0 %v243
    %541 = vmatprep.subr.bf16.mxu0 0
    %542 = vmatpush1.bf16.msra.mxu0 %v244
    %543 = vmatprep.subr.bf16.mxu0 0
    %544 = vmatpush1.bf16.msra.mxu0 0
    %545 = vmatprep.subr.bf16.mxu0 0
    %546 = vmatpush1.bf16.msra.mxu0 0
    %547 = vmatprep.subr.bf16.mxu0 0
    %548 = vmatpush1.bf16.msra.mxu0 0
    %549 = vmatprep.subr.bf16.mxu0 0
    %550 = vmatpush1.bf16.msra.mxu0 0
    %551 = vmatprep.subr.bf16.mxu0 0
    %552 = vmatpush1.bf16.msra.mxu0 0
    %553 = vmatprep.subr.bf16.mxu0 0
    %554 = vmatpush1.bf16.msra.mxu0 0
    %555 = vmatprep.subr.bf16.mxu0 0
    %556 = vmatpush1.bf16.msra.mxu0 0
    %557 = vmatprep.subr.bf16.mxu0 0
    %558 = vmatpush1.bf16.msra.mxu0 0
    %559 = vmatprep.subr.bf16.mxu0 0
    %560 = vmatpush1.bf16.msra.mxu0 0
    %561 = vmatprep.subr.bf16.mxu0 0
    %562 = vmatpush1.bf16.msra.mxu0 0
    %563 = vmatprep.subr.bf16.mxu0 0
    %564 = vmatpush1.bf16.msra.mxu0 0
    %565 = vmatprep.subr.bf16.mxu0 0
    %566 = vmatpush1.bf16.msra.mxu0 0
    %567 = vmatprep.subr.bf16.mxu0 0
    %568 = vmatpush1.bf16.msra.mxu0 0
    %569 = vmatprep.subr.bf16.mxu0 0
    %570 = vmatpush1.bf16.msra.mxu0 0
    %571 = vmatprep.mubr.bf16.mxu0 0
    %572 = vmatmul.mubr.bf16.gmra.mrb[0].mxu0 %v537
    %v573 = vpop.f32.mrb[0].mxu0
    %v574 = vadd.f32 0.0, %v573
    %v575 = vpop.f32.mrb[0].mxu0
    %v576 = vpop.f32.mrb[0].mxu0
    %v577 = vpop.f32.mrb[0].mxu0
    %578 = vdwg.mxu0
    %v579 = vadd.f32 %v217, %v574
    %v580 = vxor.u32 %v579, 2147483648
    %v581 = vmul.f32 %v580, 1.442695
    %v582 = vpow.pop %v581
    %v583 = vadd.f32 %v582, 1.0
    %v584 = vrcp.pop %v583
    %v585 = vmul.f32 1.0, %v584
    %v586 = vtanh.pop %v579
    %v587 = vmul.f32 %v585, %v525
    %589 = vrot.lane.b32.xlu0 %v586, 32
    %v590 = vpop.permute.xlu0 %589
    %v592 = vmul.f32 %v585, %v590
    %594 = vrot.lane.b32.xlu0 %v592, 32
    %v595 = vpop.permute.xlu0 %594
    %v597 = vadd.f32 %v587, %v595
    %v598 = vtanh.pop %v597
    %600 = vrot.lane.b32.xlu0 %v598, 32
    %v601 = vpop.permute.xlu0 %600
    %v603 = vmul.f32 %v585, %v601
    %v604 = vpack.c.bf16 %v603, %v603
    %606 = vrot.lane.b32.xlu0 %v604, 64
    %v607 = vpop.permute.xlu0 %606
    %v609 = vsel %vm247, %v607, 0
    %611 = vmatprep.subr.bf16.mxu0 0
    %612 = vmatpush1.bf16.msra.mxu0 %v243
    %613 = vmatprep.subr.bf16.mxu0 0
    %614 = vmatpush1.bf16.msra.mxu0 %v244
    %615 = vmatprep.subr.bf16.mxu0 0
    %616 = vmatpush1.bf16.msra.mxu0 0
    %617 = vmatprep.subr.bf16.mxu0 0
    %618 = vmatpush1.bf16.msra.mxu0 0
    %619 = vmatprep.subr.bf16.mxu0 0
    %620 = vmatpush1.bf16.msra.mxu0 0
    %621 = vmatprep.subr.bf16.mxu0 0
    %622 = vmatpush1.bf16.msra.mxu0 0
    %623 = vmatprep.subr.bf16.mxu0 0
    %624 = vmatpush1.bf16.msra.mxu0 0
    %625 = vmatprep.subr.bf16.mxu0 0
    %626 = vmatpush1.bf16.msra.mxu0 0
    %627 = vmatprep.subr.bf16.mxu0 0
    %628 = vmatpush1.bf16.msra.mxu0 0
    %629 = vmatprep.subr.bf16.mxu0 0
    %630 = vmatpush1.bf16.msra.mxu0 0
    %631 = vmatprep.subr.bf16.mxu0 0
    %632 = vmatpush1.bf16.msra.mxu0 0
    %633 = vmatprep.subr.bf16.mxu0 0
    %634 = vmatpush1.bf16.msra.mxu0 0
    %635 = vmatprep.subr.bf16.mxu0 0
    %636 = vmatpush1.bf16.msra.mxu0 0
    %637 = vmatprep.subr.bf16.mxu0 0
    %638 = vmatpush1.bf16.msra.mxu0 0
    %639 = vmatprep.subr.bf16.mxu0 0
    %640 = vmatpush1.bf16.msra.mxu0 0
    %641 = vmatprep.subr.bf16.mxu0 0
    %642 = vmatpush1.bf16.msra.mxu0 0
    %643 = vmatprep.mubr.bf16.mxu0 0
    %644 = vmatmul.mubr.bf16.gmra.mrb[0].mxu0 %v609
    %v645 = vpop.f32.mrb[0].mxu0
    %v646 = vadd.f32 0.0, %v645
    %v647 = vpop.f32.mrb[0].mxu0
    %v648 = vpop.f32.mrb[0].mxu0
    %v649 = vpop.f32.mrb[0].mxu0
    %650 = vdwg.mxu0
    %v651 = vadd.f32 %v220, %v646
    %v652 = vxor.u32 %v651, 2147483648
    %v653 = vmul.f32 %v652, 1.442695
    %v654 = vpow.pop %v653
    %v655 = vadd.f32 %v654, 1.0
    %v656 = vrcp.pop %v655
    %v657 = vmul.f32 1.0, %v656
    %v658 = vtanh.pop %v651
    %v659 = vmul.f32 %v657, %v597
    %661 = vrot.lane.b32.xlu0 %v658, 32
    %v662 = vpop.permute.xlu0 %661
    %v664 = vmul.f32 %v657, %v662
    %666 = vrot.lane.b32.xlu0 %v664, 32
    %v667 = vpop.permute.xlu0 %666
    %v669 = vadd.f32 %v659, %v667
    %v670 = vtanh.pop %v669
    %672 = vrot.lane.b32.xlu0 %v670, 32
    %v673 = vpop.permute.xlu0 %672
    %v675 = vmul.f32 %v657, %v673
    %v676 = vpack.c.bf16 %v675, %v675
    %678 = vrot.lane.b32.xlu0 %v676, 64
    %v679 = vpop.permute.xlu0 %678
    %v681 = vsel %vm247, %v679, 0
    %683 = vmatprep.subr.bf16.mxu0 0
    %684 = vmatpush1.bf16.msra.mxu0 %v243
    %685 = vmatprep.subr.bf16.mxu0 0
    %686 = vmatpush1.bf16.msra.mxu0 %v244
    %687 = vmatprep.subr.bf16.mxu0 0
    %688 = vmatpush1.bf16.msra.mxu0 0
    %689 = vmatprep.subr.bf16.mxu0 0
    %690 = vmatpush1.bf16.msra.mxu0 0
    %691 = vmatprep.subr.bf16.mxu0 0
    %692 = vmatpush1.bf16.msra.mxu0 0
    %693 = vmatprep.subr.bf16.mxu0 0
    %694 = vmatpush1.bf16.msra.mxu0 0
    %695 = vmatprep.subr.bf16.mxu0 0
    %696 = vmatpush1.bf16.msra.mxu0 0
    %697 = vmatprep.subr.bf16.mxu0 0
    %698 = vmatpush1.bf16.msra.mxu0 0
    %699 = vmatprep.subr.bf16.mxu0 0
    %700 = vmatpush1.bf16.msra.mxu0 0
    %701 = vmatprep.subr.bf16.mxu0 0
    %702 = vmatpush1.bf16.msra.mxu0 0
    %703 = vmatprep.subr.bf16.mxu0 0
    %704 = vmatpush1.bf16.msra.mxu0 0
    %705 = vmatprep.subr.bf16.mxu0 0
    %706 = vmatpush1.bf16.msra.mxu0 0
    %707 = vmatprep.subr.bf16.mxu0 0
    %708 = vmatpush1.bf16.msra.mxu0 0
    %709 = vmatprep.subr.bf16.mxu0 0
    %710 = vmatpush1.bf16.msra.mxu0 0
    %711 = vmatprep.subr.bf16.mxu0 0
    %712 = vmatpush1.bf16.msra.mxu0 0
    %713 = vmatprep.subr.bf16.mxu0 0
    %714 = vmatpush1.bf16.msra.mxu0 0
    %715 = vmatprep.mubr.bf16.mxu0 0
    %716 = vmatmul.mubr.bf16.gmra.mrb[0].mxu0 %v681
    %v717 = vpop.f32.mrb[0].mxu0
    %v718 = vadd.f32 0.0, %v717
    %v719 = vpop.f32.mrb[0].mxu0
    %v720 = vpop.f32.mrb[0].mxu0
    %v721 = vpop.f32.mrb[0].mxu0
    %722 = vdwg.mxu0
    %v723 = vadd.f32 %v225, %v718
    %v724 = vxor.u32 %v723, 2147483648
    %v725 = vmul.f32 %v724, 1.442695
    %v726 = vpow.pop %v725
    %v727 = vadd.f32 %v726, 1.0
    %v728 = vrcp.pop %v727
    %v729 = vmul.f32 1.0, %v728
    %v730 = vtanh.pop %v723
    %v731 = vmul.f32 %v729, %v669
    %733 = vrot.lane.b32.xlu0 %v730, 32
    %v734 = vpop.permute.xlu0 %733
    %v736 = vmul.f32 %v729, %v734
    %738 = vrot.lane.b32.xlu0 %v736, 32
    %v739 = vpop.permute.xlu0 %738
    %v741 = vadd.f32 %v731, %v739
    %v742 = vtanh.pop %v741
    %744 = vrot.lane.b32.xlu0 %v742, 32
    %v745 = vpop.permute.xlu0 %744
    %v747 = vmul.f32 %v729, %v745
    %v748 = vpack.c.bf16 %v747, %v747
    %750 = vrot.lane.b32.xlu0 %v748, 64
    %v751 = vpop.permute.xlu0 %750
    %v753 = vsel %vm247, %v751, 0
    %755 = vmatprep.subr.bf16.mxu0 0
    %756 = vmatpush1.bf16.msra.mxu0 %v243
    %757 = vmatprep.subr.bf16.mxu0 0
    %758 = vmatpush1.bf16.msra.mxu0 %v244
    %759 = vmatprep.subr.bf16.mxu0 0
    %760 = vmatpush1.bf16.msra.mxu0 0
    %761 = vmatprep.subr.bf16.mxu0 0
    %762 = vmatpush1.bf16.msra.mxu0 0
    %763 = vmatprep.subr.bf16.mxu0 0
    %764 = vmatpush1.bf16.msra.mxu0 0
    %765 = vmatprep.subr.bf16.mxu0 0
    %766 = vmatpush1.bf16.msra.mxu0 0
    %767 = vmatprep.subr.bf16.mxu0 0
    %768 = vmatpush1.bf16.msra.mxu0 0
    %769 = vmatprep.subr.bf16.mxu0 0
    %770 = vmatpush1.bf16.msra.mxu0 0
    %771 = vmatprep.subr.bf16.mxu0 0
    %772 = vmatpush1.bf16.msra.mxu0 0
    %773 = vmatprep.subr.bf16.mxu0 0
    %774 = vmatpush1.bf16.msra.mxu0 0
    %775 = vmatprep.subr.bf16.mxu0 0
    %776 = vmatpush1.bf16.msra.mxu0 0
    %777 = vmatprep.subr.bf16.mxu0 0
    %778 = vmatpush1.bf16.msra.mxu0 0
    %779 = vmatprep.subr.bf16.mxu0 0
    %780 = vmatpush1.bf16.msra.mxu0 0
    %781 = vmatprep.subr.bf16.mxu0 0
    %782 = vmatpush1.bf16.msra.mxu0 0
    %783 = vmatprep.subr.bf16.mxu0 0
    %784 = vmatpush1.bf16.msra.mxu0 0
    %785 = vmatprep.subr.bf16.mxu0 0
    %786 = vmatpush1.bf16.msra.mxu0 0
    %787 = vmatprep.mubr.bf16.mxu0 0
    %788 = vmatmul.mubr.bf16.gmra.mrb[0].mxu0 %v753
    %v789 = vpop.f32.mrb[0].mxu0
    %v790 = vadd.f32 0.0, %v789
    %v791 = vpop.f32.mrb[0].mxu0
    %v792 = vpop.f32.mrb[0].mxu0
    %v793 = vpop.f32.mrb[0].mxu0
    %794 = vdwg.mxu0
    %v795 = vadd.f32 %v228, %v790
    %v796 = vxor.u32 %v795, 2147483648
    %v797 = vmul.f32 %v796, 1.442695
    %v798 = vpow.pop %v797
    %v799 = vadd.f32 %v798, 1.0
    %v800 = vrcp.pop %v799
    %v801 = vmul.f32 1.0, %v800
    %v802 = vtanh.pop %v795
    %v803 = vmul.f32 %v801, %v741
    %805 = vrot.lane.b32.xlu0 %v802, 32
    %v806 = vpop.permute.xlu0 %805
    %v808 = vmul.f32 %v801, %v806
    %810 = vrot.lane.b32.xlu0 %v808, 32
    %v811 = vpop.permute.xlu0 %810
    %v813 = vadd.f32 %v803, %v811
    %v814 = vtanh.pop %v813
    %816 = vrot.lane.b32.xlu0 %v814, 32
    %v817 = vpop.permute.xlu0 %816
    %v819 = vmul.f32 %v801, %v817
    %v820 = vpack.c.bf16 %v387, %v315
    %v821 = vpack.c.bf16 %v531, %v459
    %v822 = vpack.c.bf16 %v675, %v603
    %v823 = vpack.c.bf16 %v819, %v747
    %v824 = vld [vmem:[#allocation8] sm:$0xf]
    %v825 = vld [vmem:[#allocation8 + $0x4] sm:$0xf]
    %v826 = vld [vmem:[#allocation8 + $0x8] sm:$0xf]
    %v827 = vld [vmem:[#allocation8 + $0xc] sm:$0xf]
    %v828 = vld [vmem:[%s6] sm:$0x1]
    %v830 = vlaneseq
    %v831 = vshrl.u32 %v830, 7
    %v832 = vsub.s32 0, %v831
    %v833 = vrot.slane %v828, %v832
    %839 = vrot.lane.b32.xlu0 %v820, 64
    %v840 = vpop.permute.xlu0 %839
    %841 = vrot.lane.b32.xlu0 %v821, 64
    %v842 = vpop.permute.xlu0 %841
    %843 = vrot.lane.b32.xlu0 %v822, 64
    %v844 = vpop.permute.xlu0 %843
    %845 = vrot.lane.b32.xlu0 %v823, 64
    %v846 = vpop.permute.xlu0 %845
    %v851 = vunpack.c.l.b16 %v824
    %v852 = vunpack.c.l.b16 %v825
    %v853 = vunpack.c.l.b16 %v826
    %v854 = vunpack.c.l.b16 %v827
    %v855 = vpack.c.b16 %v852, %v851
    %v856 = vpack.c.b16 %v854, %v853
    %v860 = vsel %vm247, %v840, 0
    %v863 = vsel %vm247, %v842, 0
    %v866 = vsel %vm247, %v844, 0
    %v869 = vsel %vm247, %v846, 0
    %871 = vmatprep.subr.bf16.mxu0 0
    %872 = vmatpush1.bf16.msra.mxu0 %v855
    %873 = vmatprep.subr.bf16.mxu0 0
    %874 = vmatpush1.bf16.msra.mxu0 %v856
    %875 = vmatprep.subr.bf16.mxu0 0
    %876 = vmatpush1.bf16.msra.mxu0 0
    %877 = vmatprep.subr.bf16.mxu0 0
    %878 = vmatpush1.bf16.msra.mxu0 0
    %879 = vmatprep.subr.bf16.mxu0 0
    %880 = vmatpush1.bf16.msra.mxu0 0
    %881 = vmatprep.subr.bf16.mxu0 0
    %882 = vmatpush1.bf16.msra.mxu0 0
    %883 = vmatprep.subr.bf16.mxu0 0
    %884 = vmatpush1.bf16.msra.mxu0 0
    %885 = vmatprep.subr.bf16.mxu0 0
    %886 = vmatpush1.bf16.msra.mxu0 0
    %887 = vmatprep.subr.bf16.mxu0 0
    %888 = vmatpush1.bf16.msra.mxu0 0
    %889 = vmatprep.subr.bf16.mxu0 0
    %890 = vmatpush1.bf16.msra.mxu0 0
    %891 = vmatprep.subr.bf16.mxu0 0
    %892 = vmatpush1.bf16.msra.mxu0 0
    %893 = vmatprep.subr.bf16.mxu0 0
    %894 = vmatpush1.bf16.msra.mxu0 0
    %895 = vmatprep.subr.bf16.mxu0 0
    %896 = vmatpush1.bf16.msra.mxu0 0
    %897 = vmatprep.subr.bf16.mxu0 0
    %898 = vmatpush1.bf16.msra.mxu0 0
    %899 = vmatprep.subr.bf16.mxu0 0
    %900 = vmatpush1.bf16.msra.mxu0 0
    %901 = vmatprep.subr.bf16.mxu0 0
    %902 = vmatpush1.bf16.msra.mxu0 0
    %903 = vmatprep.mubr.bf16.mxu0 0
    %904 = vmatmul.mubr.bf16.gmra.mrb[0].mxu0 %v860
    %v905 = vpop.f32.mrb[0].mxu0
    %v906 = vadd.f32 %v833, %v905
    %v907 = vpop.f32.mrb[0].mxu0
    %v908 = vpop.f32.mrb[0].mxu0
    %v909 = vadd.f32 %v833, %v908
    %v910 = vpop.f32.mrb[0].mxu0
    %911 = vmatprep.mubr.bf16.mxu0 0
    %912 = vmatmul.mubr.bf16.gmra.mrb[0].mxu0 %v863
    %v913 = vpop.f32.mrb[0].mxu0
    %v914 = vadd.f32 %v833, %v913
    %v915 = vpop.f32.mrb[0].mxu0
    %v916 = vpop.f32.mrb[0].mxu0
    %v917 = vadd.f32 %v833, %v916
    %v918 = vpop.f32.mrb[0].mxu0
    %919 = vmatprep.mubr.bf16.mxu0 0
    %920 = vmatmul.mubr.bf16.gmra.mrb[0].mxu0 %v866
    %v921 = vpop.f32.mrb[0].mxu0
    %v922 = vadd.f32 %v833, %v921
    %v923 = vpop.f32.mrb[0].mxu0
    %v924 = vpop.f32.mrb[0].mxu0
    %v925 = vadd.f32 %v833, %v924
    %v926 = vpop.f32.mrb[0].mxu0
    %927 = vmatprep.mubr.bf16.mxu0 0
    %928 = vmatmul.mubr.bf16.gmra.mrb[0].mxu0 %v869
    %v929 = vpop.f32.mrb[0].mxu0
    %v930 = vadd.f32 %v833, %v929
    %v931 = vpop.f32.mrb[0].mxu0
    %v932 = vpop.f32.mrb[0].mxu0
    %v933 = vadd.f32 %v833, %v932
    %v934 = vpop.f32.mrb[0].mxu0
    %935 = vdwg.mxu0
    %v936 = vld [vmem:[%s5] sm:$0xf]
    %v937 = vld [vmem:[%s5 + $0x4] sm:$0xf]
    %v938 = vld [vmem:[%s5 + $0x8] sm:$0xf]
    %v939 = vld [vmem:[%s5 + $0xc] sm:$0xf]
    %v944 = vunpack.c.l.b16 %v936
    %v945 = vunpack.c.l.b16 %v937
    %v946 = vunpack.c.l.b16 %v938
    %v947 = vunpack.c.l.b16 %v939
    %v948 = vpack.c.b16 %v945, %v944
    %v949 = vpack.c.b16 %v947, %v946
    %952 = vmatprep.subr.bf16.mxu0 0
    %953 = vmatpush1.bf16.msra.mxu0 %v948
    %954 = vmatprep.subr.bf16.mxu0 0
    %955 = vmatpush1.bf16.msra.mxu0 %v949
    %956 = vmatprep.subr.bf16.mxu0 0
    %957 = vmatpush1.bf16.msra.mxu0 0
    %958 = vmatprep.subr.bf16.mxu0 0
    %959 = vmatpush1.bf16.msra.mxu0 0
    %960 = vmatprep.subr.bf16.mxu0 0
    %961 = vmatpush1.bf16.msra.mxu0 0
    %962 = vmatprep.subr.bf16.mxu0 0
    %963 = vmatpush1.bf16.msra.mxu0 0
    %964 = vmatprep.subr.bf16.mxu0 0
    %965 = vmatpush1.bf16.msra.mxu0 0
    %966 = vmatprep.subr.bf16.mxu0 0
    %967 = vmatpush1.bf16.msra.mxu0 0
    %968 = vmatprep.subr.bf16.mxu0 0
    %969 = vmatpush1.bf16.msra.mxu0 0
    %970 = vmatprep.subr.bf16.mxu0 0
    %971 = vmatpush1.bf16.msra.mxu0 0
    %972 = vmatprep.subr.bf16.mxu0 0
    %973 = vmatpush1.bf16.msra.mxu0 0
    %974 = vmatprep.subr.bf16.mxu0 0
    %975 = vmatpush1.bf16.msra.mxu0 0
    %976 = vmatprep.subr.bf16.mxu0 0
    %977 = vmatpush1.bf16.msra.mxu0 0
    %978 = vmatprep.subr.bf16.mxu0 0
    %979 = vmatpush1.bf16.msra.mxu0 0
    %980 = vmatprep.subr.bf16.mxu0 0
    %981 = vmatpush1.bf16.msra.mxu0 0
    %982 = vmatprep.subr.bf16.mxu0 0
    %983 = vmatpush1.bf16.msra.mxu0 0
    %984 = vmatprep.mubr.bf16.mxu0 0
    %985 = vmatmul.mubr.bf16.gmra.mrb[0].mxu0 %v249
    %v986 = vpop.f32.mrb[0].mxu0
    %v987 = vadd.f32 0.0, %v986
    %v988 = vpop.f32.mrb[0].mxu0
    %v989 = vpop.f32.mrb[0].mxu0
    %v990 = vpop.f32.mrb[0].mxu0
    %991 = vdwg.mxu0
    %v992 = vadd.f32 %v906, %v987
    %v993 = vxor.u32 %v992, 2147483648
    %v994 = vmul.f32 %v993, 1.442695
    %v995 = vpow.pop %v994
    %v996 = vadd.f32 %v995, 1.0
    %v997 = vrcp.pop %v996
    %v998 = vmul.f32 1.0, %v997
    %v999 = vtanh.pop %v992
    %v1000 = vmul.f32 %v998, 0.0
    %1002 = vrot.lane.b32.xlu0 %v999, 32
    %v1003 = vpop.permute.xlu0 %1002
    %v1005 = vmul.f32 %v998, %v1003
    %1007 = vrot.lane.b32.xlu0 %v1005, 32
    %v1008 = vpop.permute.xlu0 %1007
    %v1010 = vadd.f32 %v1000, %v1008
    %v1011 = vtanh.pop %v1010
    %1013 = vrot.lane.b32.xlu0 %v1011, 32
    %v1014 = vpop.permute.xlu0 %1013
    %v1016 = vmul.f32 %v998, %v1014
    %v1017 = vpack.c.bf16 %v1016, %v1016
    %1019 = vrot.lane.b32.xlu0 %v1017, 64
    %v1020 = vpop.permute.xlu0 %1019
    %v1022 = vsel %vm247, %v1020, 0
    %1024 = vmatprep.subr.bf16.mxu0 0
    %1025 = vmatpush1.bf16.msra.mxu0 %v948
    %1026 = vmatprep.subr.bf16.mxu0 0
    %1027 = vmatpush1.bf16.msra.mxu0 %v949
    %1028 = vmatprep.subr.bf16.mxu0 0
    %1029 = vmatpush1.bf16.msra.mxu0 0
    %1030 = vmatprep.subr.bf16.mxu0 0
    %1031 = vmatpush1.bf16.msra.mxu0 0
    %1032 = vmatprep.subr.bf16.mxu0 0
    %1033 = vmatpush1.bf16.msra.mxu0 0
    %1034 = vmatprep.subr.bf16.mxu0 0
    %1035 = vmatpush1.bf16.msra.mxu0 0
    %1036 = vmatprep.subr.bf16.mxu0 0
    %1037 = vmatpush1.bf16.msra.mxu0 0
    %1038 = vmatprep.subr.bf16.mxu0 0
    %1039 = vmatpush1.bf16.msra.mxu0 0
    %1040 = vmatprep.subr.bf16.mxu0 0
    %1041 = vmatpush1.bf16.msra.mxu0 0
    %1042 = vmatprep.subr.bf16.mxu0 0
    %1043 = vmatpush1.bf16.msra.mxu0 0
    %1044 = vmatprep.subr.bf16.mxu0 0
    %1045 = vmatpush1.bf16.msra.mxu0 0
    %1046 = vmatprep.subr.bf16.mxu0 0
    %1047 = vmatpush1.bf16.msra.mxu0 0
    %1048 = vmatprep.subr.bf16.mxu0 0
    %1049 = vmatpush1.bf16.msra.mxu0 0
    %1050 = vmatprep.subr.bf16.mxu0 0
    %1051 = vmatpush1.bf16.msra.mxu0 0
    %1052 = vmatprep.subr.bf16.mxu0 0
    %1053 = vmatpush1.bf16.msra.mxu0 0
    %1054 = vmatprep.subr.bf16.mxu0 0
    %1055 = vmatpush1.bf16.msra.mxu0 0
    %1056 = vmatprep.mubr.bf16.mxu0 0
    %1057 = vmatmul.mubr.bf16.gmra.mrb[0].mxu0 %v1022
    %v1058 = vpop.f32.mrb[0].mxu0
    %v1059 = vadd.f32 0.0, %v1058
    %v1060 = vpop.f32.mrb[0].mxu0
    %v1061 = vpop.f32.mrb[0].mxu0
    %v1062 = vpop.f32.mrb[0].mxu0
    %1063 = vdwg.mxu0
    %v1064 = vadd.f32 %v909, %v1059
    %v1065 = vxor.u32 %v1064, 2147483648
    %v1066 = vmul.f32 %v1065, 1.442695
    %v1067 = vpow.pop %v1066
    %v1068 = vadd.f32 %v1067, 1.0
    %v1069 = vrcp.pop %v1068
    %v1070 = vmul.f32 1.0, %v1069
    %v1071 = vtanh.pop %v1064
    %v1072 = vmul.f32 %v1070, %v1010
    %1074 = vrot.lane.b32.xlu0 %v1071, 32
    %v1075 = vpop.permute.xlu0 %1074
    %v1077 = vmul.f32 %v1070, %v1075
    %1079 = vrot.lane.b32.xlu0 %v1077, 32
    %v1080 = vpop.permute.xlu0 %1079
    %v1082 = vadd.f32 %v1072, %v1080
    %v1083 = vtanh.pop %v1082
    %1085 = vrot.lane.b32.xlu0 %v1083, 32
    %v1086 = vpop.permute.xlu0 %1085
    %v1088 = vmul.f32 %v1070, %v1086
    %v1089 = vpack.c.bf16 %v1088, %v1088
    %1091 = vrot.lane.b32.xlu0 %v1089, 64
    %v1092 = vpop.permute.xlu0 %1091
    %v1094 = vsel %vm247, %v1092, 0
    %1096 = vmatprep.subr.bf16.mxu0 0
    %1097 = vmatpush1.bf16.msra.mxu0 %v948
    %1098 = vmatprep.subr.bf16.mxu0 0
    %1099 = vmatpush1.bf16.msra.mxu0 %v949
    %1100 = vmatprep.subr.bf16.mxu0 0
    %1101 = vmatpush1.bf16.msra.mxu0 0
    %1102 = vmatprep.subr.bf16.mxu0 0
    %1103 = vmatpush1.bf16.msra.mxu0 0
    %1104 = vmatprep.subr.bf16.mxu0 0
    %1105 = vmatpush1.bf16.msra.mxu0 0
    %1106 = vmatprep.subr.bf16.mxu0 0
    %1107 = vmatpush1.bf16.msra.mxu0 0
    %1108 = vmatprep.subr.bf16.mxu0 0
    %1109 = vmatpush1.bf16.msra.mxu0 0
    %1110 = vmatprep.subr.bf16.mxu0 0
    %1111 = vmatpush1.bf16.msra.mxu0 0
    %1112 = vmatprep.subr.bf16.mxu0 0
    %1113 = vmatpush1.bf16.msra.mxu0 0
    %1114 = vmatprep.subr.bf16.mxu0 0
    %1115 = vmatpush1.bf16.msra.mxu0 0
    %1116 = vmatprep.subr.bf16.mxu0 0
    %1117 = vmatpush1.bf16.msra.mxu0 0
    %1118 = vmatprep.subr.bf16.mxu0 0
    %1119 = vmatpush1.bf16.msra.mxu0 0
    %1120 = vmatprep.subr.bf16.mxu0 0
    %1121 = vmatpush1.bf16.msra.mxu0 0
    %1122 = vmatprep.subr.bf16.mxu0 0
    %1123 = vmatpush1.bf16.msra.mxu0 0
    %1124 = vmatprep.subr.bf16.mxu0 0
    %1125 = vmatpush1.bf16.msra.mxu0 0
    %1126 = vmatprep.subr.bf16.mxu0 0
    %1127 = vmatpush1.bf16.msra.mxu0 0
    %1128 = vmatprep.mubr.bf16.mxu0 0
    %1129 = vmatmul.mubr.bf16.gmra.mrb[0].mxu0 %v1094
    %v1130 = vpop.f32.mrb[0].mxu0
    %v1131 = vadd.f32 0.0, %v1130
    %v1132 = vpop.f32.mrb[0].mxu0
    %v1133 = vpop.f32.mrb[0].mxu0
    %v1134 = vpop.f32.mrb[0].mxu0
    %1135 = vdwg.mxu0
    %v1136 = vadd.f32 %v914, %v1131
    %v1137 = vxor.u32 %v1136, 2147483648
    %v1138 = vmul.f32 %v1137, 1.442695
    %v1139 = vpow.pop %v1138
    %v1140 = vadd.f32 %v1139, 1.0
    %v1141 = vrcp.pop %v1140
    %v1142 = vmul.f32 1.0, %v1141
    %v1143 = vtanh.pop %v1136
    %v1144 = vmul.f32 %v1142, %v1082
    %1146 = vrot.lane.b32.xlu0 %v1143, 32
    %v1147 = vpop.permute.xlu0 %1146
    %v1149 = vmul.f32 %v1142, %v1147
    %1151 = vrot.lane.b32.xlu0 %v1149, 32
    %v1152 = vpop.permute.xlu0 %1151
    %v1154 = vadd.f32 %v1144, %v1152
    %v1155 = vtanh.pop %v1154
    %1157 = vrot.lane.b32.xlu0 %v1155, 32
    %v1158 = vpop.permute.xlu0 %1157
    %v1160 = vmul.f32 %v1142, %v1158
    %v1161 = vpack.c.bf16 %v1160, %v1160
    %1163 = vrot.lane.b32.xlu0 %v1161, 64
    %v1164 = vpop.permute.xlu0 %1163
    %v1166 = vsel %vm247, %v1164, 0
    %1168 = vmatprep.subr.bf16.mxu0 0
    %1169 = vmatpush1.bf16.msra.mxu0 %v948
    %1170 = vmatprep.subr.bf16.mxu0 0
    %1171 = vmatpush1.bf16.msra.mxu0 %v949
    %1172 = vmatprep.subr.bf16.mxu0 0
    %1173 = vmatpush1.bf16.msra.mxu0 0
    %1174 = vmatprep.subr.bf16.mxu0 0
    %1175 = vmatpush1.bf16.msra.mxu0 0
    %1176 = vmatprep.subr.bf16.mxu0 0
    %1177 = vmatpush1.bf16.msra.mxu0 0
    %1178 = vmatprep.subr.bf16.mxu0 0
    %1179 = vmatpush1.bf16.msra.mxu0 0
    %1180 = vmatprep.subr.bf16.mxu0 0
    %1181 = vmatpush1.bf16.msra.mxu0 0
    %1182 = vmatprep.subr.bf16.mxu0 0
    %1183 = vmatpush1.bf16.msra.mxu0 0
    %1184 = vmatprep.subr.bf16.mxu0 0
    %1185 = vmatpush1.bf16.msra.mxu0 0
    %1186 = vmatprep.subr.bf16.mxu0 0
    %1187 = vmatpush1.bf16.msra.mxu0 0
    %1188 = vmatprep.subr.bf16.mxu0 0
    %1189 = vmatpush1.bf16.msra.mxu0 0
    %1190 = vmatprep.subr.bf16.mxu0 0
    %1191 = vmatpush1.bf16.msra.mxu0 0
    %1192 = vmatprep.subr.bf16.mxu0 0
    %1193 = vmatpush1.bf16.msra.mxu0 0
    %1194 = vmatprep.subr.bf16.mxu0 0
    %1195 = vmatpush1.bf16.msra.mxu0 0
    %1196 = vmatprep.subr.bf16.mxu0 0
    %1197 = vmatpush1.bf16.msra.mxu0 0
    %1198 = vmatprep.subr.bf16.mxu0 0
    %1199 = vmatpush1.bf16.msra.mxu0 0
    %1200 = vmatprep.mubr.bf16.mxu0 0
    %1201 = vmatmul.mubr.bf16.gmra.mrb[0].mxu0 %v1166
    %v1202 = vpop.f32.mrb[0].mxu0
    %v1203 = vadd.f32 0.0, %v1202
    %v1204 = vpop.f32.mrb[0].mxu0
    %v1205 = vpop.f32.mrb[0].mxu0
    %v1206 = vpop.f32.mrb[0].mxu0
    %1207 = vdwg.mxu0
    %v1208 = vadd.f32 %v917, %v1203
    %v1209 = vxor.u32 %v1208, 2147483648
    %v1210 = vmul.f32 %v1209, 1.442695
    %v1211 = vpow.pop %v1210
    %v1212 = vadd.f32 %v1211, 1.0
    %v1213 = vrcp.pop %v1212
    %v1214 = vmul.f32 1.0, %v1213
    %v1215 = vtanh.pop %v1208
    %v1216 = vmul.f32 %v1214, %v1154
    %1218 = vrot.lane.b32.xlu0 %v1215, 32
    %v1219 = vpop.permute.xlu0 %1218
    %v1221 = vmul.f32 %v1214, %v1219
    %1223 = vrot.lane.b32.xlu0 %v1221, 32
    %v1224 = vpop.permute.xlu0 %1223
    %v1226 = vadd.f32 %v1216, %v1224
    %v1227 = vtanh.pop %v1226
    %1229 = vrot.lane.b32.xlu0 %v1227, 32
    %v1230 = vpop.permute.xlu0 %1229
    %v1232 = vmul.f32 %v1214, %v1230
    %v1233 = vpack.c.bf16 %v1232, %v1232
    %1235 = vrot.lane.b32.xlu0 %v1233, 64
    %v1236 = vpop.permute.xlu0 %1235
    %v1238 = vsel %vm247, %v1236, 0
    %1240 = vmatprep.subr.bf16.mxu0 0
    %1241 = vmatpush1.bf16.msra.mxu0 %v948
    %1242 = vmatprep.subr.bf16.mxu0 0
    %1243 = vmatpush1.bf16.msra.mxu0 %v949
    %1244 = vmatprep.subr.bf16.mxu0 0
    %1245 = vmatpush1.bf16.msra.mxu0 0
    %1246 = vmatprep.subr.bf16.mxu0 0
    %1247 = vmatpush1.bf16.msra.mxu0 0
    %1248 = vmatprep.subr.bf16.mxu0 0
    %1249 = vmatpush1.bf16.msra.mxu0 0
    %1250 = vmatprep.subr.bf16.mxu0 0
    %1251 = vmatpush1.bf16.msra.mxu0 0
    %1252 = vmatprep.subr.bf16.mxu0 0
    %1253 = vmatpush1.bf16.msra.mxu0 0
    %1254 = vmatprep.subr.bf16.mxu0 0
    %1255 = vmatpush1.bf16.msra.mxu0 0
    %1256 = vmatprep.subr.bf16.mxu0 0
    %1257 = vmatpush1.bf16.msra.mxu0 0
    %1258 = vmatprep.subr.bf16.mxu0 0
    %1259 = vmatpush1.bf16.msra.mxu0 0
    %1260 = vmatprep.subr.bf16.mxu0 0
    %1261 = vmatpush1.bf16.msra.mxu0 0
    %1262 = vmatprep.subr.bf16.mxu0 0
    %1263 = vmatpush1.bf16.msra.mxu0 0
    %1264 = vmatprep.subr.bf16.mxu0 0
    %1265 = vmatpush1.bf16.msra.mxu0 0
    %1266 = vmatprep.subr.bf16.mxu0 0
    %1267 = vmatpush1.bf16.msra.mxu0 0
    %1268 = vmatprep.subr.bf16.mxu0 0
    %1269 = vmatpush1.bf16.msra.mxu0 0
    %1270 = vmatprep.subr.bf16.mxu0 0
    %1271 = vmatpush1.bf16.msra.mxu0 0
    %1272 = vmatprep.mubr.bf16.mxu0 0
    %1273 = vmatmul.mubr.bf16.gmra.mrb[0].mxu0 %v1238
    %v1274 = vpop.f32.mrb[0].mxu0
    %v1275 = vadd.f32 0.0, %v1274
    %v1276 = vpop.f32.mrb[0].mxu0
    %v1277 = vpop.f32.mrb[0].mxu0
    %v1278 = vpop.f32.mrb[0].mxu0
    %1279 = vdwg.mxu0
    %v1280 = vadd.f32 %v922, %v1275
    %v1281 = vxor.u32 %v1280, 2147483648
    %v1282 = vmul.f32 %v1281, 1.442695
    %v1283 = vpow.pop %v1282
    %v1284 = vadd.f32 %v1283, 1.0
    %v1285 = vrcp.pop %v1284
    %v1286 = vmul.f32 1.0, %v1285
    %v1287 = vtanh.pop %v1280
    %v1288 = vmul.f32 %v1286, %v1226
    %1290 = vrot.lane.b32.xlu0 %v1287, 32
    %v1291 = vpop.permute.xlu0 %1290
    %v1293 = vmul.f32 %v1286, %v1291
    %1295 = vrot.lane.b32.xlu0 %v1293, 32
    %v1296 = vpop.permute.xlu0 %1295
    %v1298 = vadd.f32 %v1288, %v1296
    %v1299 = vtanh.pop %v1298
    %1301 = vrot.lane.b32.xlu0 %v1299, 32
    %v1302 = vpop.permute.xlu0 %1301
    %v1304 = vmul.f32 %v1286, %v1302
    %v1305 = vpack.c.bf16 %v1304, %v1304
    %1307 = vrot.lane.b32.xlu0 %v1305, 64
    %v1308 = vpop.permute.xlu0 %1307
    %v1310 = vsel %vm247, %v1308, 0
    %1312 = vmatprep.subr.bf16.mxu0 0
    %1313 = vmatpush1.bf16.msra.mxu0 %v948
    %1314 = vmatprep.subr.bf16.mxu0 0
    %1315 = vmatpush1.bf16.msra.mxu0 %v949
    %1316 = vmatprep.subr.bf16.mxu0 0
    %1317 = vmatpush1.bf16.msra.mxu0 0
    %1318 = vmatprep.subr.bf16.mxu0 0
    %1319 = vmatpush1.bf16.msra.mxu0 0
    %1320 = vmatprep.subr.bf16.mxu0 0
    %1321 = vmatpush1.bf16.msra.mxu0 0
    %1322 = vmatprep.subr.bf16.mxu0 0
    %1323 = vmatpush1.bf16.msra.mxu0 0
    %1324 = vmatprep.subr.bf16.mxu0 0
    %1325 = vmatpush1.bf16.msra.mxu0 0
    %1326 = vmatprep.subr.bf16.mxu0 0
    %1327 = vmatpush1.bf16.msra.mxu0 0
    %1328 = vmatprep.subr.bf16.mxu0 0
    %1329 = vmatpush1.bf16.msra.mxu0 0
    %1330 = vmatprep.subr.bf16.mxu0 0
    %1331 = vmatpush1.bf16.msra.mxu0 0
    %1332 = vmatprep.subr.bf16.mxu0 0
    %1333 = vmatpush1.bf16.msra.mxu0 0
    %1334 = vmatprep.subr.bf16.mxu0 0
    %1335 = vmatpush1.bf16.msra.mxu0 0
    %1336 = vmatprep.subr.bf16.mxu0 0
    %1337 = vmatpush1.bf16.msra.mxu0 0
    %1338 = vmatprep.subr.bf16.mxu0 0
    %1339 = vmatpush1.bf16.msra.mxu0 0
    %1340 = vmatprep.subr.bf16.mxu0 0
    %1341 = vmatpush1.bf16.msra.mxu0 0
    %1342 = vmatprep.subr.bf16.mxu0 0
    %1343 = vmatpush1.bf16.msra.mxu0 0
    %1344 = vmatprep.mubr.bf16.mxu0 0
    %1345 = vmatmul.mubr.bf16.gmra.mrb[0].mxu0 %v1310
    %v1346 = vpop.f32.mrb[0].mxu0
    %v1347 = vadd.f32 0.0, %v1346
    %v1348 = vpop.f32.mrb[0].mxu0
    %v1349 = vpop.f32.mrb[0].mxu0
    %v1350 = vpop.f32.mrb[0].mxu0
    %1351 = vdwg.mxu0
    %v1352 = vadd.f32 %v925, %v1347
    %v1353 = vxor.u32 %v1352, 2147483648
    %v1354 = vmul.f32 %v1353, 1.442695
    %v1355 = vpow.pop %v1354
    %v1356 = vadd.f32 %v1355, 1.0
    %v1357 = vrcp.pop %v1356
    %v1358 = vmul.f32 1.0, %v1357
    %v1359 = vtanh.pop %v1352
    %v1360 = vmul.f32 %v1358, %v1298
    %1362 = vrot.lane.b32.xlu0 %v1359, 32
    %v1363 = vpop.permute.xlu0 %1362
    %v1365 = vmul.f32 %v1358, %v1363
    %1367 = vrot.lane.b32.xlu0 %v1365, 32
    %v1368 = vpop.permute.xlu0 %1367
    %v1370 = vadd.f32 %v1360, %v1368
    %v1371 = vtanh.pop %v1370
    %1373 = vrot.lane.b32.xlu0 %v1371, 32
    %v1374 = vpop.permute.xlu0 %1373
    %v1376 = vmul.f32 %v1358, %v1374
    %v1377 = vpack.c.bf16 %v1376, %v1376
    %1379 = vrot.lane.b32.xlu0 %v1377, 64
    %v1380 = vpop.permute.xlu0 %1379
    %v1382 = vsel %vm247, %v1380, 0
    %1384 = vmatprep.subr.bf16.mxu0 0
    %1385 = vmatpush1.bf16.msra.mxu0 %v948
    %1386 = vmatprep.subr.bf16.mxu0 0
    %1387 = vmatpush1.bf16.msra.mxu0 %v949
    %1388 = vmatprep.subr.bf16.mxu0 0
    %1389 = vmatpush1.bf16.msra.mxu0 0
    %1390 = vmatprep.subr.bf16.mxu0 0
    %1391 = vmatpush1.bf16.msra.mxu0 0
    %1392 = vmatprep.subr.bf16.mxu0 0
    %1393 = vmatpush1.bf16.msra.mxu0 0
    %1394 = vmatprep.subr.bf16.mxu0 0
    %1395 = vmatpush1.bf16.msra.mxu0 0
    %1396 = vmatprep.subr.bf16.mxu0 0
    %1397 = vmatpush1.bf16.msra.mxu0 0
    %1398 = vmatprep.subr.bf16.mxu0 0
    %1399 = vmatpush1.bf16.msra.mxu0 0
    %1400 = vmatprep.subr.bf16.mxu0 0
    %1401 = vmatpush1.bf16.msra.mxu0 0
    %1402 = vmatprep.subr.bf16.mxu0 0
    %1403 = vmatpush1.bf16.msra.mxu0 0
    %1404 = vmatprep.subr.bf16.mxu0 0
    %1405 = vmatpush1.bf16.msra.mxu0 0
    %1406 = vmatprep.subr.bf16.mxu0 0
    %1407 = vmatpush1.bf16.msra.mxu0 0
    %1408 = vmatprep.subr.bf16.mxu0 0
    %1409 = vmatpush1.bf16.msra.mxu0 0
    %1410 = vmatprep.subr.bf16.mxu0 0
    %1411 = vmatpush1.bf16.msra.mxu0 0
    %1412 = vmatprep.subr.bf16.mxu0 0
    %1413 = vmatpush1.bf16.msra.mxu0 0
    %1414 = vmatprep.subr.bf16.mxu0 0
    %1415 = vmatpush1.bf16.msra.mxu0 0
    %1416 = vmatprep.mubr.bf16.mxu0 0
    %1417 = vmatmul.mubr.bf16.gmra.mrb[0].mxu0 %v1382
    %v1418 = vpop.f32.mrb[0].mxu0
    %v1419 = vadd.f32 0.0, %v1418
    %v1420 = vpop.f32.mrb[0].mxu0
    %v1421 = vpop.f32.mrb[0].mxu0
    %v1422 = vpop.f32.mrb[0].mxu0
    %1423 = vdwg.mxu0
    %v1424 = vadd.f32 %v930, %v1419
    %v1425 = vxor.u32 %v1424, 2147483648
    %v1426 = vmul.f32 %v1425, 1.442695
    %v1427 = vpow.pop %v1426
    %v1428 = vadd.f32 %v1427, 1.0
    %v1429 = vrcp.pop %v1428
    %v1430 = vmul.f32 1.0, %v1429
    %v1431 = vtanh.pop %v1424
    %v1432 = vmul.f32 %v1430, %v1370
    %1434 = vrot.lane.b32.xlu0 %v1431, 32
    %v1435 = vpop.permute.xlu0 %1434
    %v1437 = vmul.f32 %v1430, %v1435
    %1439 = vrot.lane.b32.xlu0 %v1437, 32
    %v1440 = vpop.permute.xlu0 %1439
    %v1442 = vadd.f32 %v1432, %v1440
    %v1443 = vtanh.pop %v1442
    %1445 = vrot.lane.b32.xlu0 %v1443, 32
    %v1446 = vpop.permute.xlu0 %1445
    %v1448 = vmul.f32 %v1430, %v1446
    %v1449 = vpack.c.bf16 %v1448, %v1448
    %1451 = vrot.lane.b32.xlu0 %v1449, 64
    %v1452 = vpop.permute.xlu0 %1451
    %v1454 = vsel %vm247, %v1452, 0
    %1456 = vmatprep.subr.bf16.mxu0 0
    %1457 = vmatpush1.bf16.msra.mxu0 %v948
    %1458 = vmatprep.subr.bf16.mxu0 0
    %1459 = vmatpush1.bf16.msra.mxu0 %v949
    %1460 = vmatprep.subr.bf16.mxu0 0
    %1461 = vmatpush1.bf16.msra.mxu0 0
    %1462 = vmatprep.subr.bf16.mxu0 0
    %1463 = vmatpush1.bf16.msra.mxu0 0
    %1464 = vmatprep.subr.bf16.mxu0 0
    %1465 = vmatpush1.bf16.msra.mxu0 0
    %1466 = vmatprep.subr.bf16.mxu0 0
    %1467 = vmatpush1.bf16.msra.mxu0 0
    %1468 = vmatprep.subr.bf16.mxu0 0
    %1469 = vmatpush1.bf16.msra.mxu0 0
    %1470 = vmatprep.subr.bf16.mxu0 0
    %1471 = vmatpush1.bf16.msra.mxu0 0
    %1472 = vmatprep.subr.bf16.mxu0 0
    %1473 = vmatpush1.bf16.msra.mxu0 0
    %1474 = vmatprep.subr.bf16.mxu0 0
    %1475 = vmatpush1.bf16.msra.mxu0 0
    %1476 = vmatprep.subr.bf16.mxu0 0
    %1477 = vmatpush1.bf16.msra.mxu0 0
    %1478 = vmatprep.subr.bf16.mxu0 0
    %1479 = vmatpush1.bf16.msra.mxu0 0
    %1480 = vmatprep.subr.bf16.mxu0 0
    %1481 = vmatpush1.bf16.msra.mxu0 0
    %1482 = vmatprep.subr.bf16.mxu0 0
    %1483 = vmatpush1.bf16.msra.mxu0 0
    %1484 = vmatprep.subr.bf16.mxu0 0
    %1485 = vmatpush1.bf16.msra.mxu0 0
    %1486 = vmatprep.subr.bf16.mxu0 0
    %1487 = vmatpush1.bf16.msra.mxu0 0
    %1488 = vmatprep.mubr.bf16.mxu0 0
    %1489 = vmatmul.mubr.bf16.gmra.mrb[0].mxu0 %v1454
    %v1490 = vpop.f32.mrb[0].mxu0
    %v1491 = vadd.f32 0.0, %v1490
    %v1492 = vpop.f32.mrb[0].mxu0
    %v1493 = vpop.f32.mrb[0].mxu0
    %v1494 = vpop.f32.mrb[0].mxu0
    %1495 = vdwg.mxu0
    %v1496 = vadd.f32 %v933, %v1491
    %v1497 = vxor.u32 %v1496, 2147483648
    %v1498 = vmul.f32 %v1497, 1.442695
    %v1499 = vpow.pop %v1498
    %v1500 = vadd.f32 %v1499, 1.0
    %v1501 = vrcp.pop %v1500
    %v1502 = vmul.f32 1.0, %v1501
    %v1503 = vtanh.pop %v1496
    %v1504 = vmul.f32 %v1502, %v1442
    %1506 = vrot.lane.b32.xlu0 %v1503, 32
    %v1507 = vpop.permute.xlu0 %1506
    %v1509 = vmul.f32 %v1502, %v1507
    %1511 = vrot.lane.b32.xlu0 %v1509, 32
    %v1512 = vpop.permute.xlu0 %1511
    %v1514 = vadd.f32 %v1504, %v1512
    %v1515 = vld [vmem:[#allocation10] sm:$0xff]
    %v1516 = vld [vmem:[#allocation10 + $0x8] sm:$0xff]
    %v1517 = vld [vmem:[#allocation10 + $0x10] sm:$0xff]
    %v1518 = vld [vmem:[#allocation10 + $0x18] sm:$0xff]
    %v1519 = vld [vmem:[%s8] sm:$0x1]
    %v1521 = vlaneseq
    %v1522 = vshrl.u32 %v1521, 7
    %v1523 = vsub.s32 0, %v1522
    %v1524 = vrot.slane %v1519, %v1523
    %1527 = vrot.lane.b32.xlu0 %v1514, 96
    %v1528 = vpop.permute.xlu0 %1527
    %v1529 = vsel %vm247, %v1528, 0
    %1531 = vmatprep.subr.mxu0 0.0
    %1532 = vmatpush1.msra.mxu0 %v1515
    %1533 = vmatprep.subr.mxu0 0.0
    %1534 = vmatpush1.msra.mxu0 %v1516
    %1535 = vmatprep.subr.mxu0 0.0
    %1536 = vmatpush1.msra.mxu0 %v1517
    %1537 = vmatprep.subr.mxu0 0.0
    %1538 = vmatpush1.msra.mxu0 %v1518
    %1539 = vmatprep.subr.mxu0 0.0
    %1540 = vmatpush1.msra.mxu0 0.0
    %1541 = vmatprep.subr.mxu0 0.0
    %1542 = vmatpush1.msra.mxu0 0.0
    %1543 = vmatprep.subr.mxu0 0.0
    %1544 = vmatpush1.msra.mxu0 0.0
    %1545 = vmatprep.subr.mxu0 0.0
    %1546 = vmatpush1.msra.mxu0 0.0
    %1547 = vmatprep.subr.mxu0 0.0
    %1548 = vmatpush1.msra.mxu0 0.0
    %1549 = vmatprep.subr.mxu0 0.0
    %1550 = vmatpush1.msra.mxu0 0.0
    %1551 = vmatprep.subr.mxu0 0.0
    %1552 = vmatpush1.msra.mxu0 0.0
    %1553 = vmatprep.subr.mxu0 0.0
    %1554 = vmatpush1.msra.mxu0 0.0
    %1555 = vmatprep.subr.mxu0 0.0
    %1556 = vmatpush1.msra.mxu0 0.0
    %1557 = vmatprep.subr.mxu0 0.0
    %1558 = vmatpush1.msra.mxu0 0.0
    %1559 = vmatprep.subr.mxu0 0.0
    %1560 = vmatpush1.msra.mxu0 0.0
    %1561 = vmatprep.subr.mxu0 0.0
    %1562 = vmatpush1.msra.mxu0 0.0
    %1563 = vmatprep.subr.mxu0 0.0
    %1564 = vmatpush1.msra.mxu0 0.0
    %1565 = vmatprep.subr.mxu0 0.0
    %1566 = vmatpush1.msra.mxu0 0.0
    %1567 = vmatprep.subr.mxu0 0.0
    %1568 = vmatpush1.msra.mxu0 0.0
    %1569 = vmatprep.subr.mxu0 0.0
    %1570 = vmatpush1.msra.mxu0 0.0
    %1571 = vmatprep.subr.mxu0 0.0
    %1572 = vmatpush1.msra.mxu0 0.0
    %1573 = vmatprep.subr.mxu0 0.0
    %1574 = vmatpush1.msra.mxu0 0.0
    %1575 = vmatprep.subr.mxu0 0.0
    %1576 = vmatpush1.msra.mxu0 0.0
    %1577 = vmatprep.subr.mxu0 0.0
    %1578 = vmatpush1.msra.mxu0 0.0
    %1579 = vmatprep.subr.mxu0 0.0
    %1580 = vmatpush1.msra.mxu0 0.0
    %1581 = vmatprep.subr.mxu0 0.0
    %1582 = vmatpush1.msra.mxu0 0.0
    %1583 = vmatprep.subr.mxu0 0.0
    %1584 = vmatpush1.msra.mxu0 0.0
    %1585 = vmatprep.subr.mxu0 0.0
    %1586 = vmatpush1.msra.mxu0 0.0
    %1587 = vmatprep.subr.mxu0 0.0
    %1588 = vmatpush1.msra.mxu0 0.0
    %1589 = vmatprep.subr.mxu0 0.0
    %1590 = vmatpush1.msra.mxu0 0.0
    %1591 = vmatprep.subr.mxu0 0.0
    %1592 = vmatpush1.msra.mxu0 0.0
    %1593 = vmatprep.subr.mxu0 0.0
    %1594 = vmatpush1.msra.mxu0 0.0
    %1595 = vmatprep.mubr.f32.mxu0 0.0
    %1596 = vmatmul.mubr.f32.gmra.mrb[0].mxu0 %v1529
    %v1597 = vpop.f32.mrb[0].mxu0
    %v1598 = vadd.f32 %v1524, %v1597
    %v1599 = vpop.f32.mrb[0].mxu0
    %1600 = vdwg.mxu0
    %1601 = vst.msk [vmem:[#allocation11] sm:$0xff] %vm247, %v1598
    // Predicated region
    $region58: #{tpu_custom_call.1} parent=1 // pred_check
      _
    $region59: #{tpu_custom_call.1} parent=1 // pred_check_branch
      %1603 = sbr.rel (0) target = $region61
    $region60: #{tpu_custom_call.1} parent=1 // pred_region
      %s1605 = ssub.s32 128, 128
      %1606 = vsyncadd [#allocation4], %s1605
      %s1608 = sshll.u32 [#allocation11], 4
      %s1609 = int_to_ptr.vmem [resolvable:$true] %s1608
      %1611 = dma.vmem_to_hbm [thread:$0]  %s1609, 128, %s9, [#allocation4]
    $region61: #{tpu_custom_call.1} parent=1 // pred_fallthru
      _
    // Predicated region
    $region62: #{tpu_custom_call.1} parent=1 // pred_check
      _
    $region63: #{tpu_custom_call.1} parent=1 // pred_check_branch
      %1613 = sbr.rel (0) target = $region65
    $region64: #{tpu_custom_call.1} parent=1 // pred_region
      %1614 = dma.done [#allocation4], 128
    $region65: #{tpu_custom_call.1} parent=1 // pred_fallthru
      _
    %1615 = vsyncpa [#allocation3], 1
    %1616 = vsyncpa [#allocation6], 1
    %1617 = vsyncpa [#allocation9], 1
    %1618 = vsyncpa [#allocation4], 1

</llo_original>
